<compile_context>
chip_gen: v7x
topology: tpu7x:2x2x1
jax: 0.10.0
libtpu: 0.0.40
codegen_flags: <defaults>
</compile_context>

<pallas_src>
import functools

import numpy as np
import jax
import jax.numpy as jnp
from jax import lax
from jax.experimental import pallas as pl
from jax.experimental.pallas import tpu as pltpu


def convnext_block_kernel(x_ref, rowpack_ref, mask_ref, w1p_ref, w2_ref, out_ref,
                          *, H, W, K, B, C, matmul_dtype):
    """One grid step = B images in a fused lane-dense (B*C, H*W) layout.

    x_ref      : (B*C, HW)            input block, rows ordered (image, channel); residual too
    rowpack_ref: (B*C, B*C + K*K + 5) f32: [ P | dw taps | dw_bias | ln_w | ln_b | b2 | gamma ]
                                       P = block-diagonal (1/C) LayerNorm averaging matrix
    mask_ref   : (K*K, HW) f32        combined row x column validity mask per depthwise tap
    w1p_ref    : (B*hidden, B*C + 1)  block-diag pwconv1 weight (w1^T per image) | bias column
    w2_ref     : (B*C, B*hidden)      block-diag pwconv2 weight (w2^T per image)
    out_ref    : (B*C, HW)
    """
    HW = H * W
    BC = B * C
    KK = K * K
    pad = (K - 1) // 2

    x = x_ref[...].astype(jnp.float32)                        # (BC, HW), HW on lanes
    rowpack = rowpack_ref[...]
    mask = mask_ref[...]

    p_ln = rowpack[:, :BC]                                    # (BC, BC)
    taps = rowpack[:, BC:BC + KK]                             # (BC, K*K)
    dw_b = rowpack[:, BC + KK + 0:BC + KK + 1]                # (BC, 1)
    ln_w = rowpack[:, BC + KK + 1:BC + KK + 2]
    ln_b = rowpack[:, BC + KK + 2:BC + KK + 3]
    b2 = rowpack[:, BC + KK + 3:BC + KK + 4]
    gamma = rowpack[:, BC + KK + 4:BC + KK + 5]

    # ---- depthwise KxK conv: 'same' zero padding folded in as precomputed 0/1 masks on
    #      circularly lane-rolled slabs (rolls ride the XLU slot; 2 vmul + 1 vadd per tap).
    tc = pad * K + pad
    acc = x * taps[:, tc:tc + 1]                              # centre tap (mask == 1)
    for kh in range(K):
        dy = kh - pad
        for kw in range(K):
            dx = kw - pad
            if dy == 0 and dx == 0:
                continue
            off = dy * W + dx
            t = kh * K + kw
            shifted = pltpu.roll(x, shift=(-off) % HW, axis=1)
            acc = acc + (shifted * mask[t:t + 1, :]) * taps[:, t:t + 1]
    acc = acc + dw_b                                          # depthwise bias
    # TODO(synk): at large H*W, if a bundle dump shows the 8 rolls binding the XLU slot,
    # stage a zero-padded (BC, (H+2)*W) copy in VMEM scratch and read the dy=+-1 taps as
    # static row-offset loads (vld slot), keeping only the dx shifts on the XLU.

    # ---- LayerNorm over channels (eps = 1e-6): one block-diagonal (1/C) matmul both
    #      computes and broadcasts the per-image statistics across each image's C rows.
    mean = jnp.dot(p_ln, acc, preferred_element_type=jnp.float32)        # (BC, HW)
    xc = acc - mean
    var = jnp.dot(p_ln, xc * xc, preferred_element_type=jnp.float32)
    xn = xc * lax.rsqrt(var + 1e-6) * ln_w + ln_b

    # ---- pwconv1 -> GELU (exact erf, matches nn.GELU()) -> pwconv2.
    # Block-diagonal weights keep everything in the fused (BC, HW) layout (no relayout)
    # and deepen the MXU contraction from C to B*C. Operands in matmul_dtype (bf16 by
    # default) with f32 accumulation; LN stats / rsqrt / residual stay f32.
    # TODO(synk): at real ConvNeXt widths (C >= 96) switch to a (C, B*HW)-oriented wide
    # matmul (one in-kernel (B,C)->(C,B) relayout) to avoid the B-fold flop overhead of
    # the block-diagonal form; at C=4/hidden=32 the block-diag weights are tiny.
    w1p = w1p_ref[...]
    w1 = w1p[:, :BC]                                          # (B*hidden, BC)
    b1 = w1p[:, BC:BC + 1].astype(jnp.float32)                # (B*hidden, 1)
    h = jnp.dot(w1, xn.astype(matmul_dtype),
                preferred_element_type=jnp.float32) + b1      # (B*hidden, HW) f32
    h = 0.5 * h * (1.0 + lax.erf(h * 0.7071067811865476))
    y = jnp.dot(w2_ref[...], h.astype(matmul_dtype),
                preferred_element_type=jnp.float32) + b2      # (BC, HW) f32

    # ---- layer scale (gamma) + residual (drop_path = identity at rate 0.0) ----
    out_ref[...] = (x + y * gamma).astype(out_ref.dtype)


def _choose_images_per_block(N, C, hidden, HW):
    """Largest divisor B of N whose block fits a conservative VMEM budget, preferring
    >=4 grid steps (v7x: 2 TensorCores each keep a pipelined loop) and B*C % 8 == 0."""
    per_image = HW * 4 * (10 * C + 3 * hidden)   # rough live f32 bytes per image in a block
    budget = 8 << 20                             # fits v7x's scoped VMEM with ample headroom
    bmax = max(1, budget // per_image)
    divisors = [b for b in range(1, N + 1) if N % b == 0 and b <= bmax]
    for min_steps in (4, 2, 1):
        cands = [b for b in divisors if N // b >= min_steps]
        if not cands:
            continue
        aligned = [b for b in cands if (b * C) % 8 == 0 or b == N]
        if aligned:
            return max(aligned)
        if min_steps == 1:
            return max(cands)
    return 1


@functools.partial(jax.jit,
                   static_argnames=("kernel_size", "images_per_block", "matmul_dtype"))
def convnext_block(x, params, *, kernel_size=3, images_per_block=None,
                   matmul_dtype=jnp.bfloat16):
    """x: (N, C, H, W) float32 (PyTorch NCHW convention). Returns (N, C, H, W)."""
    dww, dwb, nw, nb, w1, b1, w2, b2, gamma = params
    N, C, H, W = x.shape
    K = kernel_size
    HW = H * W
    hidden = w1.shape[1]
    Cout = w2.shape[1]
    assert Cout == C, "residual add requires out_channel == in_channel"
    pad = (K - 1) // 2

    B = images_per_block if images_per_block is not None else \
        _choose_images_per_block(N, C, hidden, HW)
    assert N % B == 0, f"images_per_block={B} must divide batch {N}"
    BC, BH = B * C, B * hidden
    assert BC % 8 == 0 or BC == N * C, \
        "pick images_per_block so B*C is a multiple of 8 (sublane tile)"

    # Free reshape: rows = (image, channel), flattened H*W on the 128-wide lane axis.
    x_flat = x.reshape(N * C, HW)

    # ---- one-time tiny parameter repacking (no activation-sized HBM traffic) ----
    # Per-(image, channel)-row vectors, tiled over the B images of a block.
    ch = jnp.tile(jnp.concatenate(
        [dwb.reshape(C, 1), nw.reshape(C, 1), nb.reshape(C, 1),
         b2.reshape(C, 1), gamma.reshape(C, 1)], axis=1), (B, 1))          # (BC, 5)
    dw_taps = jnp.tile(dww.T, (B, 1))                                       # (BC, K*K)
    # Block-diagonal LayerNorm averaging matrix (compile-time constant).
    p_ln = jnp.asarray(np.kron(np.eye(B, dtype=np.float32),
                               np.full((C, C), 1.0 / C, np.float32)))       # (BC, BC)
    rowpack = jnp.concatenate([p_ln, dw_taps, ch], axis=1).astype(jnp.float32)

    # Block-diagonal pointwise-conv weights (w^T per image); MXU operands in matmul_dtype.
    eye_b = jnp.eye(B, dtype=jnp.float32)
    w1big = jnp.kron(eye_b, w1.T.astype(jnp.float32))                       # (BH, BC)
    w2big = jnp.kron(eye_b, w2.T.astype(jnp.float32))                       # (BC, BH)
    b1big = jnp.tile(b1.reshape(hidden, 1).astype(jnp.float32), (B, 1))     # (BH, 1)
    w1pack = jnp.concatenate([w1big, b1big], axis=1).astype(matmul_dtype)   # (BH, BC+1)
    w2big = w2big.astype(matmul_dtype)

    # Combined row x column validity mask per tap (compile-time constant; replaces the
    # in-kernel iota/compare row masks).
    ys, xs = np.divmod(np.arange(HW), W)
    m = np.zeros((K * K, HW), np.float32)
    for kh in range(K):
        for kw in range(K):
            dy, dx = kh - pad, kw - pad
            m[kh * K + kw] = ((ys + dy >= 0) & (ys + dy < H) &
                              (xs + dx >= 0) & (xs + dx < W))
    mask = jnp.asarray(m)

    kernel = functools.partial(convnext_block_kernel, H=H, W=W, K=K, B=B, C=C,
                               matmul_dtype=matmul_dtype)

    def const_spec(a):
        zeros = (0,) * a.ndim
        return pl.BlockSpec(a.shape, lambda n, z=zeros: z)

    out_flat = pl.pallas_call(
        kernel,
        out_shape=jax.ShapeDtypeStruct((N * C, HW), x.dtype),
        grid=(N // B,),
        in_specs=[
            pl.BlockSpec((BC, HW), lambda n: (n, 0)),   # x: lane- and sublane-dense block
            const_spec(rowpack),
            const_spec(mask),
            const_spec(w1pack),
            const_spec(w2big),
        ],
        out_specs=pl.BlockSpec((BC, HW), lambda n: (n, 0)),
        compiler_params=pltpu.CompilerParams(
            dimension_semantics=("parallel",),          # megacore-shard the batch axis
            vmem_limit_bytes=32 * 1024 * 1024,          # portable across v5e/v6e/v7x
        ),
        # TODO(synk): if the x DMA is still exposed after batching, raise pipeline depth on
        # the x in_spec with pipeline_mode=pl.Buffered(3).
    )(x_flat, rowpack, mask, w1pack, w2big)

    return out_flat.reshape(N, C, H, W)


def reference_forward(x, params, kernel_size=3):
    """Pure-JAX reference matching the PyTorch module's forward (f32 end to end)."""
    dww, dwb, nw, nb, w1, b1, w2, b2, gamma = params
    N, C, H, W = x.shape
    K = kernel_size
    xn = jnp.transpose(x, (0, 2, 3, 1))
    w4 = dww.reshape(K, K, 1, C)  # HWIO, depthwise via feature_group_count
    y = lax.conv_general_dilated(
        xn, w4, (1, 1), 'SAME',
        dimension_numbers=('NHWC', 'HWIO', 'NHWC'),
        feature_group_count=C) + dwb.reshape(1, 1, 1, C)
    mean = y.mean(-1, keepdims=True)
    var = ((y - mean) ** 2).mean(-1, keepdims=True)
    y = (y - mean) / jnp.sqrt(var + 1e-6) * nw.reshape(C) + nb.reshape(C)
    h = y @ w1 + b1.reshape(-1)
    h = 0.5 * h * (1.0 + lax.erf(h * 0.7071067811865476))
    o = h @ w2 + b2.reshape(-1)
    o = o * gamma.reshape(-1)
    return x + jnp.transpose(o, (0, 3, 1, 2))


if __name__ == "__main__":
    # Shapes consistent with the module: in_channel=out_channel=4, hidden=32, 16x16 images.
    C, H, W = 4, 16, 16
    hidden, Cout, K = 32, 4, 3

    key = jax.random.PRNGKey(0)
    ks = jax.random.split(key, 9)

    # Deterministic parameter init (shapes follow the PyTorch module's __init__).
    dww = jax.random.normal(ks[0], (K * K, C), jnp.float32) * 0.1     # depthwise weight
    dwb = jax.random.normal(ks[1], (1, C), jnp.float32) * 0.1         # depthwise bias
    nw = 1.0 + 0.1 * jax.random.normal(ks[7], (1, C), jnp.float32)    # LayerNorm weight
    nb = 0.1 * jax.random.normal(ks[8], (1, C), jnp.float32)          # LayerNorm bias
    w1 = jax.random.normal(ks[2], (C, hidden), jnp.float32) * 0.1     # pwconv1 (C -> hidden)
    b1 = jax.random.normal(ks[3], (1, hidden), jnp.float32) * 0.1
    w2 = jax.random.normal(ks[4], (hidden, Cout), jnp.float32) * 0.1  # pwconv2 (hidden -> Cout)
    b2 = jax.random.normal(ks[5], (1, Cout), jnp.float32) * 0.1
    gamma = jnp.full((1, Cout), 0.5, jnp.float32)                     # layer scale
    params = (dww, dwb, nw, nb, w1, b1, w2, b2, gamma)

    # Primary batched case (N=16 -> 4 images per step, 4 grid steps) and the module's
    # small example shape (N=2 -> one 8-row block).
    for N in (16, 2):
        x = jax.random.normal(ks[6], (N, C, H, W), jnp.float32)
        ref = jax.block_until_ready(reference_forward(x, params, kernel_size=K))

        # Exact-semantics check: f32 MXU operands must match the f32 reference tightly.
        out_f32 = jax.block_until_ready(
            convnext_block(x, params, kernel_size=K, matmul_dtype=jnp.float32))
        assert out_f32.shape == (N, Cout, H, W)
        err32 = float(jnp.max(jnp.abs(out_f32 - ref)))
        assert jnp.allclose(out_f32, ref, atol=1e-5, rtol=1e-5), f"f32 max abs err {err32}"

        # Default (perf) path: bf16 MXU operands with f32 accumulation for the pointwise
        # convs; LN stats / rsqrt / residual stay f32. Looser tolerance vs f32 reference.
        out_bf16 = jax.block_until_ready(convnext_block(x, params, kernel_size=K))
        errbf = float(jnp.max(jnp.abs(out_bf16 - ref)))
        assert jnp.allclose(out_bf16, ref, atol=5e-3, rtol=5e-3), f"bf16 max abs err {errbf}"

    print("KERNEL_OK")
</pallas_src>

<mosaic_0001>
module attributes {stable_mosaic.version = 11 : i64} {
  func.func @convnext_block_kernel(%arg0: i32, %arg1: memref<16x256xf32, #tpu.memory_space<vmem>>, %arg2: memref<16x30xf32, #tpu.memory_space<vmem>>, %arg3: memref<9x256xf32, #tpu.memory_space<vmem>>, %arg4: memref<128x17xf32, #tpu.memory_space<vmem>>, %arg5: memref<16x128xf32, #tpu.memory_space<vmem>>, %arg6: memref<16x256xf32, #tpu.memory_space<vmem>>) attributes {dimension_semantics = [#tpu.dimension_semantics<parallel>], iteration_bounds = array<i64: 4>, scalar_prefetch = 0 : i64, scratch_operands = 0 : i64, tpu.core_type = #tpu.core_type<tc>, window_params = [{transform_indices = @transform_0, window_bounds = array<i64: 16, 256>}, {pipeline_mode = #tpu.pipeline_mode<synchronous>, transform_indices = @transform_1, window_bounds = array<i64: 16, 30>}, {pipeline_mode = #tpu.pipeline_mode<synchronous>, transform_indices = @transform_2, window_bounds = array<i64: 9, 256>}, {pipeline_mode = #tpu.pipeline_mode<synchronous>, transform_indices = @transform_3, window_bounds = array<i64: 128, 17>}, {pipeline_mode = #tpu.pipeline_mode<synchronous>, transform_indices = @transform_4, window_bounds = array<i64: 16, 128>}, {transform_indices = @transform_5, window_bounds = array<i64: 16, 256>}]} {
    %c0 = arith.constant 0 : index
    %c0_0 = arith.constant 0 : index
    %0 = vector.load %arg1[%c0, %c0_0] : memref<16x256xf32, #tpu.memory_space<vmem>>, vector<16x256xf32>
    %c0_1 = arith.constant 0 : index
    %c0_2 = arith.constant 0 : index
    %1 = vector.load %arg2[%c0_1, %c0_2] : memref<16x30xf32, #tpu.memory_space<vmem>>, vector<16x30xf32>
    %c0_3 = arith.constant 0 : index
    %c0_4 = arith.constant 0 : index
    %2 = vector.load %arg3[%c0_3, %c0_4] : memref<9x256xf32, #tpu.memory_space<vmem>>, vector<9x256xf32>
    %3 = vector.extract_strided_slice %1 {offsets = [0, 0], sizes = [16, 16], strides = [1, 1]} : vector<16x30xf32> to vector<16x16xf32>
    %4 = vector.extract_strided_slice %1 {offsets = [0, 16], sizes = [16, 9], strides = [1, 1]} : vector<16x30xf32> to vector<16x9xf32>
    %5 = vector.extract_strided_slice %1 {offsets = [0, 25], sizes = [16, 1], strides = [1, 1]} : vector<16x30xf32> to vector<16x1xf32>
    %6 = vector.extract_strided_slice %1 {offsets = [0, 26], sizes = [16, 1], strides = [1, 1]} : vector<16x30xf32> to vector<16x1xf32>
    %7 = vector.extract_strided_slice %1 {offsets = [0, 27], sizes = [16, 1], strides = [1, 1]} : vector<16x30xf32> to vector<16x1xf32>
    %8 = vector.extract_strided_slice %1 {offsets = [0, 28], sizes = [16, 1], strides = [1, 1]} : vector<16x30xf32> to vector<16x1xf32>
    %9 = vector.extract_strided_slice %1 {offsets = [0, 29], sizes = [16, 1], strides = [1, 1]} : vector<16x30xf32> to vector<16x1xf32>
    %10 = vector.extract_strided_slice %4 {offsets = [0, 4], sizes = [16, 1], strides = [1, 1]} : vector<16x9xf32> to vector<16x1xf32>
    %11 = vector.broadcast %10 : vector<16x1xf32> to vector<16x256xf32>
    %12 = arith.mulf %0, %11 : vector<16x256xf32>
    %c17_i32 = arith.constant 17 : i32
    %13 = tpu.dynamic_rotate %0 by %c17_i32 dim 1 : vector<16x256xf32>, i32 -> vector<16x256xf32>
    %14 = vector.extract_strided_slice %2 {offsets = [0, 0], sizes = [1, 256], strides = [1, 1]} : vector<9x256xf32> to vector<1x256xf32>
    %15 = vector.broadcast %14 : vector<1x256xf32> to vector<16x256xf32>
    %16 = arith.mulf %13, %15 : vector<16x256xf32>
    %17 = vector.extract_strided_slice %4 {offsets = [0, 0], sizes = [16, 1], strides = [1, 1]} : vector<16x9xf32> to vector<16x1xf32>
    %18 = vector.broadcast %17 : vector<16x1xf32> to vector<16x256xf32>
    %19 = arith.mulf %16, %18 : vector<16x256xf32>
    %20 = arith.addf %12, %19 : vector<16x256xf32>
    %c16_i32 = arith.constant 16 : i32
    %21 = tpu.dynamic_rotate %0 by %c16_i32 dim 1 : vector<16x256xf32>, i32 -> vector<16x256xf32>
    %22 = vector.extract_strided_slice %2 {offsets = [1, 0], sizes = [1, 256], strides = [1, 1]} : vector<9x256xf32> to vector<1x256xf32>
    %23 = vector.broadcast %22 : vector<1x256xf32> to vector<16x256xf32>
    %24 = arith.mulf %21, %23 : vector<16x256xf32>
    %25 = vector.extract_strided_slice %4 {offsets = [0, 1], sizes = [16, 1], strides = [1, 1]} : vector<16x9xf32> to vector<16x1xf32>
    %26 = vector.broadcast %25 : vector<16x1xf32> to vector<16x256xf32>
    %27 = arith.mulf %24, %26 : vector<16x256xf32>
    %28 = arith.addf %20, %27 : vector<16x256xf32>
    %c15_i32 = arith.constant 15 : i32
    %29 = tpu.dynamic_rotate %0 by %c15_i32 dim 1 : vector<16x256xf32>, i32 -> vector<16x256xf32>
    %30 = vector.extract_strided_slice %2 {offsets = [2, 0], sizes = [1, 256], strides = [1, 1]} : vector<9x256xf32> to vector<1x256xf32>
    %31 = vector.broadcast %30 : vector<1x256xf32> to vector<16x256xf32>
    %32 = arith.mulf %29, %31 : vector<16x256xf32>
    %33 = vector.extract_strided_slice %4 {offsets = [0, 2], sizes = [16, 1], strides = [1, 1]} : vector<16x9xf32> to vector<16x1xf32>
    %34 = vector.broadcast %33 : vector<16x1xf32> to vector<16x256xf32>
    %35 = arith.mulf %32, %34 : vector<16x256xf32>
    %36 = arith.addf %28, %35 : vector<16x256xf32>
    %c1_i32 = arith.constant 1 : i32
    %37 = tpu.dynamic_rotate %0 by %c1_i32 dim 1 : vector<16x256xf32>, i32 -> vector<16x256xf32>
    %38 = vector.extract_strided_slice %2 {offsets = [3, 0], sizes = [1, 256], strides = [1, 1]} : vector<9x256xf32> to vector<1x256xf32>
    %39 = vector.broadcast %38 : vector<1x256xf32> to vector<16x256xf32>
    %40 = arith.mulf %37, %39 : vector<16x256xf32>
    %41 = vector.extract_strided_slice %4 {offsets = [0, 3], sizes = [16, 1], strides = [1, 1]} : vector<16x9xf32> to vector<16x1xf32>
    %42 = vector.broadcast %41 : vector<16x1xf32> to vector<16x256xf32>
    %43 = arith.mulf %40, %42 : vector<16x256xf32>
    %44 = arith.addf %36, %43 : vector<16x256xf32>
    %c255_i32 = arith.constant 255 : i32
    %45 = tpu.dynamic_rotate %0 by %c255_i32 dim 1 : vector<16x256xf32>, i32 -> vector<16x256xf32>
    %46 = vector.extract_strided_slice %2 {offsets = [5, 0], sizes = [1, 256], strides = [1, 1]} : vector<9x256xf32> to vector<1x256xf32>
    %47 = vector.broadcast %46 : vector<1x256xf32> to vector<16x256xf32>
    %48 = arith.mulf %45, %47 : vector<16x256xf32>
    %49 = vector.extract_strided_slice %4 {offsets = [0, 5], sizes = [16, 1], strides = [1, 1]} : vector<16x9xf32> to vector<16x1xf32>
    %50 = vector.broadcast %49 : vector<16x1xf32> to vector<16x256xf32>
    %51 = arith.mulf %48, %50 : vector<16x256xf32>
    %52 = arith.addf %44, %51 : vector<16x256xf32>
    %c241_i32 = arith.constant 241 : i32
    %53 = tpu.dynamic_rotate %0 by %c241_i32 dim 1 : vector<16x256xf32>, i32 -> vector<16x256xf32>
    %54 = vector.extract_strided_slice %2 {offsets = [6, 0], sizes = [1, 256], strides = [1, 1]} : vector<9x256xf32> to vector<1x256xf32>
    %55 = vector.broadcast %54 : vector<1x256xf32> to vector<16x256xf32>
    %56 = arith.mulf %53, %55 : vector<16x256xf32>
    %57 = vector.extract_strided_slice %4 {offsets = [0, 6], sizes = [16, 1], strides = [1, 1]} : vector<16x9xf32> to vector<16x1xf32>
    %58 = vector.broadcast %57 : vector<16x1xf32> to vector<16x256xf32>
    %59 = arith.mulf %56, %58 : vector<16x256xf32>
    %60 = arith.addf %52, %59 : vector<16x256xf32>
    %c240_i32 = arith.constant 240 : i32
    %61 = tpu.dynamic_rotate %0 by %c240_i32 dim 1 : vector<16x256xf32>, i32 -> vector<16x256xf32>
    %62 = vector.extract_strided_slice %2 {offsets = [7, 0], sizes = [1, 256], strides = [1, 1]} : vector<9x256xf32> to vector<1x256xf32>
    %63 = vector.broadcast %62 : vector<1x256xf32> to vector<16x256xf32>
    %64 = arith.mulf %61, %63 : vector<16x256xf32>
    %65 = vector.extract_strided_slice %4 {offsets = [0, 7], sizes = [16, 1], strides = [1, 1]} : vector<16x9xf32> to vector<16x1xf32>
    %66 = vector.broadcast %65 : vector<16x1xf32> to vector<16x256xf32>
    %67 = arith.mulf %64, %66 : vector<16x256xf32>
    %68 = arith.addf %60, %67 : vector<16x256xf32>
    %c239_i32 = arith.constant 239 : i32
    %69 = tpu.dynamic_rotate %0 by %c239_i32 dim 1 : vector<16x256xf32>, i32 -> vector<16x256xf32>
    %70 = vector.extract_strided_slice %2 {offsets = [8, 0], sizes = [1, 256], strides = [1, 1]} : vector<9x256xf32> to vector<1x256xf32>
    %71 = vector.broadcast %70 : vector<1x256xf32> to vector<16x256xf32>
    %72 = arith.mulf %69, %71 : vector<16x256xf32>
    %73 = vector.extract_strided_slice %4 {offsets = [0, 8], sizes = [16, 1], strides = [1, 1]} : vector<16x9xf32> to vector<16x1xf32>
    %74 = vector.broadcast %73 : vector<16x1xf32> to vector<16x256xf32>
    %75 = arith.mulf %72, %74 : vector<16x256xf32>
    %76 = arith.addf %68, %75 : vector<16x256xf32>
    %77 = vector.broadcast %5 : vector<16x1xf32> to vector<16x256xf32>
    %78 = arith.addf %76, %77 : vector<16x256xf32>
    %cst = arith.constant dense<0.000000e+00> : vector<16x256xf32>
    %79 = tpu.matmul %3, %78, %cst {dimension_numbers = #tpu.dot_dimension_numbers<[1], [0], [0], [1], [0, 0, 1, 1], [], []>} : vector<16x16xf32>, vector<16x256xf32>, vector<16x256xf32> -> vector<16x256xf32>
    %80 = arith.subf %78, %79 : vector<16x256xf32>
    %81 = arith.mulf %80, %80 : vector<16x256xf32>
    %cst_5 = arith.constant dense<0.000000e+00> : vector<16x256xf32>
    %82 = tpu.matmul %3, %81, %cst_5 {dimension_numbers = #tpu.dot_dimension_numbers<[1], [0], [0], [1], [0, 0, 1, 1], [], []>} : vector<16x16xf32>, vector<16x256xf32>, vector<16x256xf32> -> vector<16x256xf32>
    %cst_6 = arith.constant 9.99999997E-7 : f32
    %83 = vector.broadcast %cst_6 : f32 to vector<16x256xf32>
    %84 = arith.addf %82, %83 : vector<16x256xf32>
    %85 = math.rsqrt %84 : vector<16x256xf32>
    %86 = arith.mulf %80, %85 : vector<16x256xf32>
    %87 = vector.broadcast %6 : vector<16x1xf32> to vector<16x256xf32>
    %88 = arith.mulf %86, %87 : vector<16x256xf32>
    %89 = vector.broadcast %7 : vector<16x1xf32> to vector<16x256xf32>
    %90 = arith.addf %88, %89 : vector<16x256xf32>
    %c0_7 = arith.constant 0 : index
    %c0_8 = arith.constant 0 : index
    %91 = vector.load %arg4[%c0_7, %c0_8] : memref<128x17xf32, #tpu.memory_space<vmem>>, vector<128x17xf32>
    %92 = vector.extract_strided_slice %91 {offsets = [0, 0], sizes = [128, 16], strides = [1, 1]} : vector<128x17xf32> to vector<128x16xf32>
    %93 = vector.extract_strided_slice %91 {offsets = [0, 16], sizes = [128, 1], strides = [1, 1]} : vector<128x17xf32> to vector<128x1xf32>
    %cst_9 = arith.constant dense<0.000000e+00> : vector<128x256xf32>
    %94 = tpu.matmul %92, %90, %cst_9 {dimension_numbers = #tpu.dot_dimension_numbers<[1], [0], [0], [1], [0, 0, 1, 1], [], []>} : vector<128x16xf32>, vector<16x256xf32>, vector<128x256xf32> -> vector<128x256xf32>
    %95 = vector.broadcast %93 : vector<128x1xf32> to vector<128x256xf32>
    %96 = arith.addf %94, %95 : vector<128x256xf32>
    %cst_10 = arith.constant 5.000000e-01 : f32
    %97 = vector.broadcast %cst_10 : f32 to vector<128x256xf32>
    %98 = arith.mulf %97, %96 : vector<128x256xf32>
    %cst_11 = arith.constant 0.707106769 : f32
    %99 = vector.broadcast %cst_11 : f32 to vector<128x256xf32>
    %100 = arith.mulf %96, %99 : vector<128x256xf32>
    %101 = math.erf %100 : vector<128x256xf32>
    %cst_12 = arith.constant 1.000000e+00 : f32
    %102 = vector.broadcast %cst_12 : f32 to vector<128x256xf32>
    %103 = arith.addf %102, %101 : vector<128x256xf32>
    %104 = arith.mulf %98, %103 : vector<128x256xf32>
    %c0_13 = arith.constant 0 : index
    %c0_14 = arith.constant 0 : index
    %105 = vector.load %arg5[%c0_13, %c0_14] : memref<16x128xf32, #tpu.memory_space<vmem>>, vector<16x128xf32>
    %cst_15 = arith.constant dense<0.000000e+00> : vector<16x256xf32>
    %106 = tpu.matmul %105, %104, %cst_15 {dimension_numbers = #tpu.dot_dimension_numbers<[1], [0], [0], [1], [0, 0, 1, 1], [], []>} : vector<16x128xf32>, vector<128x256xf32>, vector<16x256xf32> -> vector<16x256xf32>
    %107 = vector.broadcast %8 : vector<16x1xf32> to vector<16x256xf32>
    %108 = arith.addf %106, %107 : vector<16x256xf32>
    %109 = vector.broadcast %9 : vector<16x1xf32> to vector<16x256xf32>
    %110 = arith.mulf %108, %109 : vector<16x256xf32>
    %111 = arith.addf %0, %110 : vector<16x256xf32>
    %c0_16 = arith.constant 0 : index
    %c0_17 = arith.constant 0 : index
    %112 = vector.load %arg6[%c0_16, %c0_17] : memref<16x256xf32, #tpu.memory_space<vmem>>, vector<16x256xf32>
    tpu.vector_store %arg6[%c0_16, %c0_17], %111 {strides = array<i32>} : memref<16x256xf32, #tpu.memory_space<vmem>>, vector<16x256xf32>,
    return
  }
  func.func @transform_0(%arg0: i32) -> (i32, i32) {
    %c0_i32 = arith.constant 0 : i32
    %c0_i32_0 = arith.constant 0 : i32
    return %arg0, %c0_i32 : i32, i32
  }
  func.func @transform_1(%arg0: i32) -> (i32, i32) {
    %c0_i32 = arith.constant 0 : i32
    %c0_i32_0 = arith.constant 0 : i32
    %c0_i32_1 = arith.constant 0 : i32
    return %c0_i32, %c0_i32_0 : i32, i32
  }
  func.func @transform_2(%arg0: i32) -> (i32, i32) {
    %c0_i32 = arith.constant 0 : i32
    %c0_i32_0 = arith.constant 0 : i32
    %c0_i32_1 = arith.constant 0 : i32
    return %c0_i32, %c0_i32_0 : i32, i32
  }
  func.func @transform_3(%arg0: i32) -> (i32, i32) {
    %c0_i32 = arith.constant 0 : i32
    %c0_i32_0 = arith.constant 0 : i32
    %c0_i32_1 = arith.constant 0 : i32
    return %c0_i32, %c0_i32_0 : i32, i32
  }
  func.func @transform_4(%arg0: i32) -> (i32, i32) {
    %c0_i32 = arith.constant 0 : i32
    %c0_i32_0 = arith.constant 0 : i32
    %c0_i32_1 = arith.constant 0 : i32
    return %c0_i32, %c0_i32_0 : i32, i32
  }
  func.func @transform_5(%arg0: i32) -> (i32, i32) {
    %c0_i32 = arith.constant 0 : i32
    %c0_i32_0 = arith.constant 0 : i32
    return %arg0, %c0_i32 : i32, i32
  }
}

</mosaic_0001>

<llo_original>
// kernel: convnext_block.1
$region0: #{convnext_block.1}
  #allocation0 [shape = 'u32[]', space=smem, size = 0x4, offset = 0x4, fixed_abs, tag = 'smem constant byte address 0x4 - core index']
  #allocation1 [shape = 'u32[144,128]{1,0:T(1,128)}', space=vmem, size = 0x12000, scoped, tag = 'internal scratch']
  %s0 = inlined_call_operand.vmem [shape: f32[64,256], index: 0, kind: input, shape index: {}]
  %s1 = inlined_call_operand.vmem [shape: f32[16,30], index: 1, kind: input, shape index: {}]
  %s2 = inlined_call_operand.vmem [shape: f32[9,256], index: 2, kind: input, shape index: {}]
  %s3 = inlined_call_operand.vmem [shape: f32[128,17], index: 3, kind: input, shape index: {}]
  %s4 = inlined_call_operand.vmem [shape: f32[16,128], index: 4, kind: input, shape index: {}]
  %s5 = inlined_call_operand.vmem [shape: f32[64,256], index: 5, kind: output, shape index: {}]
  %s6 = sld [smem:[#allocation0]]
  $region53: #{convnext_block.1} parent=0
    _
  %s8 = ssub.s32 1, %s6
  %s9 = scalar_select 0, %s8, %s6
  loop: start=0, step=1, limit=6
  $region2: #{convnext_block.1} parent=0 // loop_pre_header
    _
  $region3: #{convnext_block.1} parent=0 // loop_header
    %s11 = sphi 0, %s15
    %p12 = scmp.ge.s32.totalorder %s11, 6
    %s21 = sphi 0, %s23
    %s24 = sphi 0, %s21
    %s25 = sphi 0, %s24
    %s41 = sphi 0, %s25
    %s45 = sphi 0, %s45
    %s47 = sphi 0, %s45
    %s48 = sphi 0, %s47
    %s62 = sphi 0, %s48
    %s66 = sphi 0, %s66
    %s68 = sphi 0, %s66
    %s69 = sphi 0, %s68
    %s83 = sphi 0, %s69
    %s87 = sphi 0, %s87
    %s89 = sphi 0, %s87
    %s90 = sphi 0, %s89
    %s104 = sphi 0, %s90
    %s108 = sphi 0, %s108
    %s110 = sphi 0, %s108
    %s111 = sphi 0, %s110
    %s125 = sphi 0, %s111
    %s131 = sphi 0, %s133
    %s134 = sphi 0, %s131
    %s135 = sphi 0, %s134
    %s151 = sphi 0, %s135
  $region4: #{convnext_block.1} parent=0 // loop_header_branch
    %14 = sbr.rel (%p12) target = $region8
  $region5: #{convnext_block.1} parent=0 // loop_body
    %s16 = ssub.s32 %s11, 1
    %s17 = ssub.s32 %s11, 2
    %s18 = sadd.s32 %s11, 1
    %s19 = ssub.s32 %s11, %s18
    %p20 = scmp.eq.s32.totalorder %s19, 0
    %s22 = sadd.s32 %s21, 1
    %s23 = scalar_select %p20, %s21, %s22
    %p26 = pneg %p20
    %p27 = scmp.eq.s32.totalorder %s11, 3
    %p28 = por %p26, %p27
    %p29 = scmp.ne.s32.totalorder %s21, %s24
    %p30 = scmp.eq.s32.totalorder %s11, 0
    %p31 = por %p29, %p30
    %p32 = scmp.ne.s32.totalorder %s21, %s24
    %p33 = scmp.eq.s32.totalorder %s16, 3
    %p34 = por %p32, %p33
    %p35 = scmp.ne.s32.totalorder %s24, %s25
    %p36 = scmp.eq.s32.totalorder %s16, 0
    %p37 = por %p35, %p36
    %p38 = scmp.ne.s32.totalorder %s24, %s25
    %p39 = scmp.eq.s32.totalorder %s17, 3
    %p40 = por %p38, %p39
    %p42 = scmp.ne.s32.totalorder %s25, %s41
    %p43 = scmp.eq.s32.totalorder %s17, 0
    %p44 = por %p42, %p43
    %s46 = sadd.s32 %s45, 1
    %p49 = scmp.eq.s32.totalorder %s11, 3
    %p50 = scmp.ne.s32.totalorder %s45, %s47
    %p51 = scmp.eq.s32.totalorder %s11, 0
    %p52 = por %p50, %p51
    %p53 = scmp.ne.s32.totalorder %s45, %s47
    %p54 = scmp.eq.s32.totalorder %s16, 3
    %p55 = por %p53, %p54
    %p56 = scmp.ne.s32.totalorder %s47, %s48
    %p57 = scmp.eq.s32.totalorder %s16, 0
    %p58 = por %p56, %p57
    %p59 = scmp.ne.s32.totalorder %s47, %s48
    %p60 = scmp.eq.s32.totalorder %s17, 3
    %p61 = por %p59, %p60
    %p63 = scmp.ne.s32.totalorder %s48, %s62
    %p64 = scmp.eq.s32.totalorder %s17, 0
    %p65 = por %p63, %p64
    %s67 = sadd.s32 %s66, 1
    %p70 = scmp.eq.s32.totalorder %s11, 3
    %p71 = scmp.ne.s32.totalorder %s66, %s68
    %p72 = scmp.eq.s32.totalorder %s11, 0
    %p73 = por %p71, %p72
    %p74 = scmp.ne.s32.totalorder %s66, %s68
    %p75 = scmp.eq.s32.totalorder %s16, 3
    %p76 = por %p74, %p75
    %p77 = scmp.ne.s32.totalorder %s68, %s69
    %p78 = scmp.eq.s32.totalorder %s16, 0
    %p79 = por %p77, %p78
    %p80 = scmp.ne.s32.totalorder %s68, %s69
    %p81 = scmp.eq.s32.totalorder %s17, 3
    %p82 = por %p80, %p81
    %p84 = scmp.ne.s32.totalorder %s69, %s83
    %p85 = scmp.eq.s32.totalorder %s17, 0
    %p86 = por %p84, %p85
    %s88 = sadd.s32 %s87, 1
    %p91 = scmp.eq.s32.totalorder %s11, 3
    %p92 = scmp.ne.s32.totalorder %s87, %s89
    %p93 = scmp.eq.s32.totalorder %s11, 0
    %p94 = por %p92, %p93
    %p95 = scmp.ne.s32.totalorder %s87, %s89
    %p96 = scmp.eq.s32.totalorder %s16, 3
    %p97 = por %p95, %p96
    %p98 = scmp.ne.s32.totalorder %s89, %s90
    %p99 = scmp.eq.s32.totalorder %s16, 0
    %p100 = por %p98, %p99
    %p101 = scmp.ne.s32.totalorder %s89, %s90
    %p102 = scmp.eq.s32.totalorder %s17, 3
    %p103 = por %p101, %p102
    %p105 = scmp.ne.s32.totalorder %s90, %s104
    %p106 = scmp.eq.s32.totalorder %s17, 0
    %p107 = por %p105, %p106
    %s109 = sadd.s32 %s108, 1
    %p112 = scmp.eq.s32.totalorder %s11, 3
    %p113 = scmp.ne.s32.totalorder %s108, %s110
    %p114 = scmp.eq.s32.totalorder %s11, 0
    %p115 = por %p113, %p114
    %p116 = scmp.ne.s32.totalorder %s108, %s110
    %p117 = scmp.eq.s32.totalorder %s16, 3
    %p118 = por %p116, %p117
    %p119 = scmp.ne.s32.totalorder %s110, %s111
    %p120 = scmp.eq.s32.totalorder %s16, 0
    %p121 = por %p119, %p120
    %p122 = scmp.ne.s32.totalorder %s110, %s111
    %p123 = scmp.eq.s32.totalorder %s17, 3
    %p124 = por %p122, %p123
    %p126 = scmp.ne.s32.totalorder %s111, %s125
    %p127 = scmp.eq.s32.totalorder %s17, 0
    %p128 = por %p126, %p127
    %s129 = ssub.s32 %s11, %s18
    %p130 = scmp.eq.s32.totalorder %s129, 0
    %s132 = sadd.s32 %s131, 1
    %s133 = scalar_select %p130, %s131, %s132
    %p136 = pneg %p130
    %p137 = scmp.eq.s32.totalorder %s11, 3
    %p138 = por %p136, %p137
    %p139 = scmp.ne.s32.totalorder %s131, %s134
    %p140 = scmp.eq.s32.totalorder %s11, 0
    %p141 = por %p139, %p140
    %p142 = scmp.ne.s32.totalorder %s131, %s134
    %p143 = scmp.eq.s32.totalorder %s16, 3
    %p144 = por %p142, %p143
    %p145 = scmp.ne.s32.totalorder %s134, %s135
    %p146 = scmp.eq.s32.totalorder %s16, 0
    %p147 = por %p145, %p146
    %p148 = scmp.ne.s32.totalorder %s134, %s135
    %p149 = scmp.eq.s32.totalorder %s17, 3
    %p150 = por %p148, %p149
    %p152 = scmp.ne.s32.totalorder %s135, %s151
    %p153 = scmp.eq.s32.totalorder %s17, 0
    %p154 = por %p152, %p153
    %p155 = scmp.le.s32.totalorder 1, %s11
    %p156 = scmp.lt.s32.totalorder %s11, 5
    %p157 = pnand %p155, %p156
    %p158 = pneg %p157
    // Predicated region
    $region9: #{convnext_block.1} parent=5 // pred_check
      _
    $region10: #{convnext_block.1} parent=5 // pred_check_branch
      %160 = sbr.rel (%p157) target = $region12
    $region11: #{convnext_block.1} parent=5 // pred_region
      %s161 = ssub.s32 %s11, 1
      // Predicated region
      $region13: #{convnext_block.1} parent=11 // pred_check
        %p162 = pneg %p58
      $region14: #{convnext_block.1} parent=11 // pred_check_branch
        %164 = sbr.rel (%p162) target = $region16
      $region15: #{convnext_block.1} parent=11 // pred_region
        _
      $region16: #{convnext_block.1} parent=11 // pred_fallthru
        _
      // Predicated region
      $region17: #{convnext_block.1} parent=11 // pred_check
        %p165 = pneg %p79
      $region18: #{convnext_block.1} parent=11 // pred_check_branch
        %167 = sbr.rel (%p165) target = $region20
      $region19: #{convnext_block.1} parent=11 // pred_region
        _
      $region20: #{convnext_block.1} parent=11 // pred_fallthru
        _
      // Predicated region
      $region21: #{convnext_block.1} parent=11 // pred_check
        %p168 = pneg %p100
      $region22: #{convnext_block.1} parent=11 // pred_check_branch
        %170 = sbr.rel (%p168) target = $region24
      $region23: #{convnext_block.1} parent=11 // pred_region
        _
      $region24: #{convnext_block.1} parent=11 // pred_fallthru
        _
      // Predicated region
      $region25: #{convnext_block.1} parent=11 // pred_check
        %p171 = pneg %p121
      $region26: #{convnext_block.1} parent=11 // pred_check_branch
        %173 = sbr.rel (%p171) target = $region28
      $region27: #{convnext_block.1} parent=11 // pred_region
        _
      $region28: #{convnext_block.1} parent=11 // pred_fallthru
        _
    $region12: #{convnext_block.1} parent=5 // pred_fallthru
      _
    %p174 = scmp.lt.s32.totalorder %s11, 4
    // Predicated region
    $region29: #{convnext_block.1} parent=5 // pred_check
      %p175 = pneg %p174
    $region30: #{convnext_block.1} parent=5 // pred_check_branch
      %177 = sbr.rel (%p175) target = $region32
    $region31: #{convnext_block.1} parent=5 // pred_region
      // Predicated region
      $region33: #{convnext_block.1} parent=31 // pred_check
        %p178 = pneg %p31
      $region34: #{convnext_block.1} parent=31 // pred_check_branch
        %180 = sbr.rel (%p178) target = $region36
      $region35: #{convnext_block.1} parent=31 // pred_region
        %s181 = smul.u32 2, %s11
        %p182 = scmp.lt.s32.totalorder %s181, 7
        %s183 = scalar_select %p182, %s181, 7
        %s184 = smul.addr %s183, 2
        %s185 = smul.addr %s184, 8
        %s186 = scalar_lea.vmem %s0, %s185
        %s187 = smul.u32 2, %s11
      $region36: #{convnext_block.1} parent=31 // pred_fallthru
        _
    $region32: #{convnext_block.1} parent=5 // pred_fallthru
      _
    %p188 = scmp.le.s32.totalorder 1, %s11
    %p189 = scmp.lt.s32.totalorder %s11, 5
    %p190 = pnand %p188, %p189
    %p191 = pneg %p190
    // Predicated region
    $region37: #{convnext_block.1} parent=5 // pred_check
      _
    $region38: #{convnext_block.1} parent=5 // pred_check_branch
      %193 = sbr.rel (%p190) target = $region40
    $region39: #{convnext_block.1} parent=5 // pred_region
      %s194 = ssub.s32 %s11, 1
      %s195 = smul.u32 2, %s16
      %p196 = scmp.lt.s32.totalorder %s195, 7
      %s197 = scalar_select %p196, %s195, 7
      %s198 = smul.addr %s197, 2
      %s199 = smul.addr %s198, 8
      %s200 = scalar_lea.vmem %s0, %s199
      %p201 = pneg %p37
      %p202 = pneg %p34
      %p203 = pneg %p58
      %p204 = pneg %p55
      %p205 = pneg %p79
      %p206 = pneg %p76
      %p207 = pneg %p100
      %p208 = pneg %p97
      %p209 = pneg %p121
      %p210 = pneg %p118
      %p211 = pneg %p147
      %p212 = pneg %p144
      %s213 = smul.u32 2, %s16
      %p214 = scmp.lt.s32.totalorder %s213, 7
      %s215 = scalar_select %p214, %s213, 7
      %s216 = smul.addr %s215, 2
      %s217 = smul.addr %s216, 8
      %s218 = scalar_lea.vmem %s5, %s217
      %s219 = smul.u32 2, %s16
      %p220 = scmp.lt.s32.totalorder %s219, 7
      %s221 = scalar_select %p220, %s219, 7
      %s222 = smul.addr %s221, 2
      %s223 = smul.addr %s222, 8
      %s224 = scalar_lea.vmem %s0, %s223
      %s225 = smul.u32 2, %s16
      %s226 = smul.u32 2, %s16
      %p227 = scmp.lt.s32.totalorder %s226, 7
      %s228 = scalar_select %p227, %s226, 7
      %s229 = smul.addr %s228, 2
      %s230 = smul.addr %s229, 8
      %s231 = scalar_lea.vmem %s5, %s230
      %s232 = smul.u32 2, %s16
      %v233 = vld [vmem:[%s224] sm:$0xff]
      %v234 = vld [vmem:[%s224 + $0x8] sm:$0xff]
      %v235 = vld [vmem:[%s224 + $0x10] sm:$0xff]
      %v236 = vld [vmem:[%s224 + $0x18] sm:$0xff]
      %v237 = vld [vmem:[%s1] sm:$0xff]
      %v238 = vld [vmem:[%s1 + $0x8] sm:$0xff]
      %v239 = vld [vmem:[%s2] sm:$0xff]
      %v240 = vld [vmem:[%s2 + $0x8] sm:$0xff]
      %v241 = vld [vmem:[%s2 + $0x10] sm:$0x1]
      %v242 = vld [vmem:[%s2 + $0x18] sm:$0x1]
      %244 = vset.pattern.permute.xlu0 20
      %245 = vperm.xlu0 %244, %v237
      %v246 = vpop.permute.xlu0 %245
      %249 = vset.pattern.permute.xlu0 20
      %250 = vperm.xlu0 %249, %v238
      %v251 = vpop.permute.xlu0 %250
      %v253 = vmul.f32 %v233, %v246
      %v254 = vmul.f32 %v234, %v246
      %v255 = vmul.f32 %v235, %v251
      %v256 = vmul.f32 %v236, %v251
      %257 = vrot.lane.b32.xlu0 %v233, 17
      %v258 = vpop.permute.xlu0 %257
      %259 = vrot.lane.b32.xlu0 %v235, 17
      %v260 = vpop.permute.xlu0 %259
      %261 = vrot.lane.b32.xlu0 %v234, 17
      %v262 = vpop.permute.xlu0 %261
      %263 = vrot.lane.b32.xlu0 %v236, 17
      %v264 = vpop.permute.xlu0 %263
      %v265 = vlaneseq
      %v266 = vand.u32 %v265, 127
      %vm267 = vcmp.lt.s32.totalorder %v266, 17
      %v268 = vsel %vm267, %v258, %v262
      %v269 = vsel %vm267, %v260, %v264
      %v270 = vsel %vm267, %v262, %v258
      %v271 = vsel %vm267, %v264, %v260
      %v272 = vlaneseq
      %v273 = vshrl.u32 %v272, 7
      %v274 = vsub.s32 0, %v273
      %v275 = vrot.slane %v239, %v274
      %v276 = vlaneseq
      %v277 = vshrl.u32 %v276, 7
      %v278 = vsub.s32 0, %v277
      %v279 = vrot.slane %v240, %v278
      %v280 = vmul.f32 %v270, %v275
      %v281 = vmul.f32 %v268, %v279
      %v282 = vmul.f32 %v271, %v275
      %v283 = vmul.f32 %v269, %v279
      %284 = vset.pattern.permute.xlu0 16
      %285 = vperm.xlu0 %284, %v237
      %v286 = vpop.permute.xlu0 %285
      %288 = vset.pattern.permute.xlu0 16
      %289 = vperm.xlu0 %288, %v238
      %v290 = vpop.permute.xlu0 %289
      %v292 = vmul.f32 %v280, %v286
      %v293 = vmul.f32 %v281, %v286
      %v294 = vmul.f32 %v282, %v290
      %v295 = vmul.f32 %v283, %v290
      %v296 = vadd.f32 %v253, %v292
      %v297 = vadd.f32 %v254, %v293
      %v298 = vadd.f32 %v255, %v294
      %v299 = vadd.f32 %v256, %v295
      %300 = vrot.lane.b32.xlu0 %v233, 16
      %v301 = vpop.permute.xlu0 %300
      %302 = vrot.lane.b32.xlu0 %v235, 16
      %v303 = vpop.permute.xlu0 %302
      %304 = vrot.lane.b32.xlu0 %v234, 16
      %v305 = vpop.permute.xlu0 %304
      %306 = vrot.lane.b32.xlu0 %v236, 16
      %v307 = vpop.permute.xlu0 %306
      %vm308 = vcmp.lt.s32.totalorder %v266, 16
      %v309 = vsel %vm308, %v301, %v305
      %v310 = vsel %vm308, %v303, %v307
      %v311 = vsel %vm308, %v305, %v301
      %v312 = vsel %vm308, %v307, %v303
      %v313 = vlaneseq
      %v314 = vshrl.u32 %v313, 7
      %v315 = vsub.s32 1, %v314
      %v316 = vrot.slane %v239, %v315
      %v317 = vlaneseq
      %v318 = vshrl.u32 %v317, 7
      %v319 = vsub.s32 1, %v318
      %v320 = vrot.slane %v240, %v319
      %v321 = vmul.f32 %v311, %v316
      %v322 = vmul.f32 %v309, %v320
      %v323 = vmul.f32 %v312, %v316
      %v324 = vmul.f32 %v310, %v320
      %325 = vset.pattern.permute.xlu0 17
      %326 = vperm.xlu0 %325, %v237
      %v327 = vpop.permute.xlu0 %326
      %329 = vset.pattern.permute.xlu0 17
      %330 = vperm.xlu0 %329, %v238
      %v331 = vpop.permute.xlu0 %330
      %v333 = vmul.f32 %v321, %v327
      %v334 = vmul.f32 %v322, %v327
      %v335 = vmul.f32 %v323, %v331
      %v336 = vmul.f32 %v324, %v331
      %v337 = vadd.f32 %v296, %v333
      %v338 = vadd.f32 %v297, %v334
      %v339 = vadd.f32 %v298, %v335
      %v340 = vadd.f32 %v299, %v336
      %341 = vrot.lane.b32.xlu0 %v233, 15
      %v342 = vpop.permute.xlu0 %341
      %343 = vrot.lane.b32.xlu0 %v235, 15
      %v344 = vpop.permute.xlu0 %343
      %345 = vrot.lane.b32.xlu0 %v234, 15
      %v346 = vpop.permute.xlu0 %345
      %347 = vrot.lane.b32.xlu0 %v236, 15
      %v348 = vpop.permute.xlu0 %347
      %vm349 = vcmp.lt.s32.totalorder %v266, 15
      %v350 = vsel %vm349, %v342, %v346
      %v351 = vsel %vm349, %v344, %v348
      %v352 = vsel %vm349, %v346, %v342
      %v353 = vsel %vm349, %v348, %v344
      %v354 = vlaneseq
      %v355 = vshrl.u32 %v354, 7
      %v356 = vsub.s32 2, %v355
      %v357 = vrot.slane %v239, %v356
      %v358 = vlaneseq
      %v359 = vshrl.u32 %v358, 7
      %v360 = vsub.s32 2, %v359
      %v361 = vrot.slane %v240, %v360
      %v362 = vmul.f32 %v352, %v357
      %v363 = vmul.f32 %v350, %v361
      %v364 = vmul.f32 %v353, %v357
      %v365 = vmul.f32 %v351, %v361
      %366 = vset.pattern.permute.xlu0 18
      %367 = vperm.xlu0 %366, %v237
      %v368 = vpop.permute.xlu0 %367
      %370 = vset.pattern.permute.xlu0 18
      %371 = vperm.xlu0 %370, %v238
      %v372 = vpop.permute.xlu0 %371
      %v374 = vmul.f32 %v362, %v368
      %v375 = vmul.f32 %v363, %v368
      %v376 = vmul.f32 %v364, %v372
      %v377 = vmul.f32 %v365, %v372
      %v378 = vadd.f32 %v337, %v374
      %v379 = vadd.f32 %v338, %v375
      %v380 = vadd.f32 %v339, %v376
      %v381 = vadd.f32 %v340, %v377
      %382 = vrot.lane.b32.xlu0 %v233, 1
      %v383 = vpop.permute.xlu0 %382
      %384 = vrot.lane.b32.xlu0 %v235, 1
      %v385 = vpop.permute.xlu0 %384
      %386 = vrot.lane.b32.xlu0 %v234, 1
      %v387 = vpop.permute.xlu0 %386
      %388 = vrot.lane.b32.xlu0 %v236, 1
      %v389 = vpop.permute.xlu0 %388
      %vm390 = vcmp.lt.s32.totalorder %v266, 1
      %v391 = vsel %vm390, %v383, %v387
      %v392 = vsel %vm390, %v385, %v389
      %v393 = vsel %vm390, %v387, %v383
      %v394 = vsel %vm390, %v389, %v385
      %v395 = vlaneseq
      %v396 = vshrl.u32 %v395, 7
      %v397 = vsub.s32 3, %v396
      %v398 = vrot.slane %v239, %v397
      %v399 = vlaneseq
      %v400 = vshrl.u32 %v399, 7
      %v401 = vsub.s32 3, %v400
      %v402 = vrot.slane %v240, %v401
      %v403 = vmul.f32 %v393, %v398
      %v404 = vmul.f32 %v391, %v402
      %v405 = vmul.f32 %v394, %v398
      %v406 = vmul.f32 %v392, %v402
      %407 = vset.pattern.permute.xlu0 19
      %408 = vperm.xlu0 %407, %v237
      %v409 = vpop.permute.xlu0 %408
      %411 = vset.pattern.permute.xlu0 19
      %412 = vperm.xlu0 %411, %v238
      %v413 = vpop.permute.xlu0 %412
      %v415 = vmul.f32 %v403, %v409
      %v416 = vmul.f32 %v404, %v409
      %v417 = vmul.f32 %v405, %v413
      %v418 = vmul.f32 %v406, %v413
      %v419 = vadd.f32 %v378, %v415
      %v420 = vadd.f32 %v379, %v416
      %v421 = vadd.f32 %v380, %v417
      %v422 = vadd.f32 %v381, %v418
      %423 = vrot.lane.b32.xlu0 %v233, 127
      %v424 = vpop.permute.xlu0 %423
      %425 = vrot.lane.b32.xlu0 %v235, 127
      %v426 = vpop.permute.xlu0 %425
      %427 = vrot.lane.b32.xlu0 %v234, 127
      %v428 = vpop.permute.xlu0 %427
      %429 = vrot.lane.b32.xlu0 %v236, 127
      %v430 = vpop.permute.xlu0 %429
      %vm431 = vcmp.lt.s32.totalorder %v266, 127
      %v432 = vsel %vm431, %v424, %v428
      %v433 = vsel %vm431, %v426, %v430
      %v434 = vsel %vm431, %v428, %v424
      %v435 = vsel %vm431, %v430, %v426
      %v436 = vlaneseq
      %v437 = vshrl.u32 %v436, 7
      %v438 = vsub.s32 5, %v437
      %v439 = vrot.slane %v239, %v438
      %v440 = vlaneseq
      %v441 = vshrl.u32 %v440, 7
      %v442 = vsub.s32 5, %v441
      %v443 = vrot.slane %v240, %v442
      %v444 = vmul.f32 %v432, %v439
      %v445 = vmul.f32 %v434, %v443
      %v446 = vmul.f32 %v433, %v439
      %v447 = vmul.f32 %v435, %v443
      %448 = vset.pattern.permute.xlu0 21
      %449 = vperm.xlu0 %448, %v237
      %v450 = vpop.permute.xlu0 %449
      %452 = vset.pattern.permute.xlu0 21
      %453 = vperm.xlu0 %452, %v238
      %v454 = vpop.permute.xlu0 %453
      %v456 = vmul.f32 %v444, %v450
      %v457 = vmul.f32 %v445, %v450
      %v458 = vmul.f32 %v446, %v454
      %v459 = vmul.f32 %v447, %v454
      %v460 = vadd.f32 %v419, %v456
      %v461 = vadd.f32 %v420, %v457
      %v462 = vadd.f32 %v421, %v458
      %v463 = vadd.f32 %v422, %v459
      %464 = vrot.lane.b32.xlu0 %v233, 113
      %v465 = vpop.permute.xlu0 %464
      %466 = vrot.lane.b32.xlu0 %v235, 113
      %v467 = vpop.permute.xlu0 %466
      %468 = vrot.lane.b32.xlu0 %v234, 113
      %v469 = vpop.permute.xlu0 %468
      %470 = vrot.lane.b32.xlu0 %v236, 113
      %v471 = vpop.permute.xlu0 %470
      %vm472 = vcmp.lt.s32.totalorder %v266, 113
      %v473 = vsel %vm472, %v465, %v469
      %v474 = vsel %vm472, %v467, %v471
      %v475 = vsel %vm472, %v469, %v465
      %v476 = vsel %vm472, %v471, %v467
      %v477 = vlaneseq
      %v478 = vshrl.u32 %v477, 7
      %v479 = vsub.s32 6, %v478
      %v480 = vrot.slane %v239, %v479
      %v481 = vlaneseq
      %v482 = vshrl.u32 %v481, 7
      %v483 = vsub.s32 6, %v482
      %v484 = vrot.slane %v240, %v483
      %v485 = vmul.f32 %v473, %v480
      %v486 = vmul.f32 %v475, %v484
      %v487 = vmul.f32 %v474, %v480
      %v488 = vmul.f32 %v476, %v484
      %489 = vset.pattern.permute.xlu0 22
      %490 = vperm.xlu0 %489, %v237
      %v491 = vpop.permute.xlu0 %490
      %493 = vset.pattern.permute.xlu0 22
      %494 = vperm.xlu0 %493, %v238
      %v495 = vpop.permute.xlu0 %494
      %v497 = vmul.f32 %v485, %v491
      %v498 = vmul.f32 %v486, %v491
      %v499 = vmul.f32 %v487, %v495
      %v500 = vmul.f32 %v488, %v495
      %v501 = vadd.f32 %v460, %v497
      %v502 = vadd.f32 %v461, %v498
      %v503 = vadd.f32 %v462, %v499
      %v504 = vadd.f32 %v463, %v500
      %505 = vrot.lane.b32.xlu0 %v233, 112
      %v506 = vpop.permute.xlu0 %505
      %507 = vrot.lane.b32.xlu0 %v235, 112
      %v508 = vpop.permute.xlu0 %507
      %509 = vrot.lane.b32.xlu0 %v234, 112
      %v510 = vpop.permute.xlu0 %509
      %511 = vrot.lane.b32.xlu0 %v236, 112
      %v512 = vpop.permute.xlu0 %511
      %vm513 = vcmp.lt.s32.totalorder %v266, 112
      %v514 = vsel %vm513, %v506, %v510
      %v515 = vsel %vm513, %v508, %v512
      %v516 = vsel %vm513, %v510, %v506
      %v517 = vsel %vm513, %v512, %v508
      %v518 = vlaneseq
      %v519 = vshrl.u32 %v518, 7
      %v520 = vsub.s32 7, %v519
      %v521 = vrot.slane %v239, %v520
      %v522 = vlaneseq
      %v523 = vshrl.u32 %v522, 7
      %v524 = vsub.s32 7, %v523
      %v525 = vrot.slane %v240, %v524
      %v526 = vmul.f32 %v514, %v521
      %v527 = vmul.f32 %v516, %v525
      %v528 = vmul.f32 %v515, %v521
      %v529 = vmul.f32 %v517, %v525
      %530 = vset.pattern.permute.xlu0 23
      %531 = vperm.xlu0 %530, %v237
      %v532 = vpop.permute.xlu0 %531
      %534 = vset.pattern.permute.xlu0 23
      %535 = vperm.xlu0 %534, %v238
      %v536 = vpop.permute.xlu0 %535
      %v538 = vmul.f32 %v526, %v532
      %v539 = vmul.f32 %v527, %v532
      %v540 = vmul.f32 %v528, %v536
      %v541 = vmul.f32 %v529, %v536
      %v542 = vadd.f32 %v501, %v538
      %v543 = vadd.f32 %v502, %v539
      %v544 = vadd.f32 %v503, %v540
      %v545 = vadd.f32 %v504, %v541
      %546 = vrot.lane.b32.xlu0 %v233, 111
      %v547 = vpop.permute.xlu0 %546
      %548 = vrot.lane.b32.xlu0 %v235, 111
      %v549 = vpop.permute.xlu0 %548
      %550 = vrot.lane.b32.xlu0 %v234, 111
      %v551 = vpop.permute.xlu0 %550
      %552 = vrot.lane.b32.xlu0 %v236, 111
      %v553 = vpop.permute.xlu0 %552
      %vm554 = vcmp.lt.s32.totalorder %v266, 111
      %v555 = vsel %vm554, %v547, %v551
      %v556 = vsel %vm554, %v549, %v553
      %v557 = vsel %vm554, %v551, %v547
      %v558 = vsel %vm554, %v553, %v549
      %v559 = vlaneseq
      %v560 = vshrl.u32 %v559, 7
      %v561 = vsub.s32 0, %v560
      %v562 = vrot.slane %v241, %v561
      %v563 = vlaneseq
      %v564 = vshrl.u32 %v563, 7
      %v565 = vsub.s32 0, %v564
      %v566 = vrot.slane %v242, %v565
      %v567 = vmul.f32 %v555, %v562
      %v568 = vmul.f32 %v557, %v566
      %v569 = vmul.f32 %v556, %v562
      %v570 = vmul.f32 %v558, %v566
      %571 = vset.pattern.permute.xlu0 24
      %572 = vperm.xlu0 %571, %v237
      %v573 = vpop.permute.xlu0 %572
      %575 = vset.pattern.permute.xlu0 24
      %576 = vperm.xlu0 %575, %v238
      %v577 = vpop.permute.xlu0 %576
      %v579 = vmul.f32 %v567, %v573
      %v580 = vmul.f32 %v568, %v573
      %v581 = vmul.f32 %v569, %v577
      %v582 = vmul.f32 %v570, %v577
      %v583 = vadd.f32 %v542, %v579
      %v584 = vadd.f32 %v543, %v580
      %v585 = vadd.f32 %v544, %v581
      %v586 = vadd.f32 %v545, %v582
      %587 = vset.pattern.permute.xlu0 25
      %588 = vperm.xlu0 %587, %v237
      %v589 = vpop.permute.xlu0 %588
      %591 = vset.pattern.permute.xlu0 25
      %592 = vperm.xlu0 %591, %v238
      %v593 = vpop.permute.xlu0 %592
      %v595 = vadd.f32 %v583, %v589
      %v596 = vadd.f32 %v584, %v589
      %v597 = vadd.f32 %v585, %v593
      %v598 = vadd.f32 %v586, %v593
      %vm599 = vcmask 130048
      %v600 = vsel %vm599, %v237, 0
      %v602 = vsel %vm599, %v238, 0
      %604 = vmatprep.subr.mxu0 %v596
      %605 = vmatpush1.msra.mxu0 %v595
      %606 = vmatprep.subr.mxu0 %v598
      %607 = vmatpush1.msra.mxu0 %v597
      %608 = vmatprep.subr.mxu0 0.0
      %609 = vmatpush1.msra.mxu0 0.0
      %610 = vmatprep.subr.mxu0 0.0
      %611 = vmatpush1.msra.mxu0 0.0
      %612 = vmatprep.subr.mxu0 0.0
      %613 = vmatpush1.msra.mxu0 0.0
      %614 = vmatprep.subr.mxu0 0.0
      %615 = vmatpush1.msra.mxu0 0.0
      %616 = vmatprep.subr.mxu0 0.0
      %617 = vmatpush1.msra.mxu0 0.0
      %618 = vmatprep.subr.mxu0 0.0
      %619 = vmatpush1.msra.mxu0 0.0
      %620 = vmatprep.subr.mxu0 0.0
      %621 = vmatpush1.msra.mxu0 0.0
      %622 = vmatprep.subr.mxu0 0.0
      %623 = vmatpush1.msra.mxu0 0.0
      %624 = vmatprep.subr.mxu0 0.0
      %625 = vmatpush1.msra.mxu0 0.0
      %626 = vmatprep.subr.mxu0 0.0
      %627 = vmatpush1.msra.mxu0 0.0
      %628 = vmatprep.subr.mxu0 0.0
      %629 = vmatpush1.msra.mxu0 0.0
      %630 = vmatprep.subr.mxu0 0.0
      %631 = vmatpush1.msra.mxu0 0.0
      %632 = vmatprep.subr.mxu0 0.0
      %633 = vmatpush1.msra.mxu0 0.0
      %634 = vmatprep.subr.mxu0 0.0
      %635 = vmatpush1.msra.mxu0 0.0
      %636 = vmatprep.subr.mxu0 0.0
      %637 = vmatpush1.msra.mxu0 0.0
      %638 = vmatprep.subr.mxu0 0.0
      %639 = vmatpush1.msra.mxu0 0.0
      %640 = vmatprep.subr.mxu0 0.0
      %641 = vmatpush1.msra.mxu0 0.0
      %642 = vmatprep.subr.mxu0 0.0
      %643 = vmatpush1.msra.mxu0 0.0
      %644 = vmatprep.subr.mxu0 0.0
      %645 = vmatpush1.msra.mxu0 0.0
      %646 = vmatprep.subr.mxu0 0.0
      %647 = vmatpush1.msra.mxu0 0.0
      %648 = vmatprep.subr.mxu0 0.0
      %649 = vmatpush1.msra.mxu0 0.0
      %650 = vmatprep.subr.mxu0 0.0
      %651 = vmatpush1.msra.mxu0 0.0
      %652 = vmatprep.subr.mxu0 0.0
      %653 = vmatpush1.msra.mxu0 0.0
      %654 = vmatprep.subr.mxu0 0.0
      %655 = vmatpush1.msra.mxu0 0.0
      %656 = vmatprep.subr.mxu0 0.0
      %657 = vmatpush1.msra.mxu0 0.0
      %658 = vmatprep.subr.mxu0 0.0
      %659 = vmatpush1.msra.mxu0 0.0
      %660 = vmatprep.subr.mxu0 0.0
      %661 = vmatpush1.msra.mxu0 0.0
      %662 = vmatprep.subr.mxu0 0.0
      %663 = vmatpush1.msra.mxu0 0.0
      %664 = vmatprep.subr.mxu0 0.0
      %665 = vmatpush1.msra.mxu0 0.0
      %666 = vmatprep.subr.mxu0 0.0
      %667 = vmatpush1.msra.mxu0 0.0
      %668 = vmatprep.mubr.f32.mxu0 0.0
      %669 = vmatmul.mubr.f32.gmra.mrb[0].mxu0 %v600
      %v670 = vpop.f32.mrb[0].mxu0
      %v671 = vadd.f32 0.0, %v670
      %v672 = vpop.f32.mrb[0].mxu0
      %v673 = vadd.f32 0.0, %v672
      %674 = vmatprep.mubr.f32.mxu0 0.0
      %675 = vmatmul.mubr.f32.gmra.mrb[0].mxu0 %v602
      %v676 = vpop.f32.mrb[0].mxu0
      %v677 = vadd.f32 0.0, %v676
      %v678 = vpop.f32.mrb[0].mxu0
      %v679 = vadd.f32 0.0, %v678
      %680 = vdwg.mxu0
      %v681 = vsub.f32 %v595, %v671
      %v682 = vsub.f32 %v596, %v673
      %v683 = vsub.f32 %v597, %v677
      %v684 = vsub.f32 %v598, %v679
      %v685 = vmul.f32 %v681, %v681
      %v686 = vmul.f32 %v682, %v682
      %v687 = vmul.f32 %v683, %v683
      %v688 = vmul.f32 %v684, %v684
      %689 = vmatprep.subr.mxu0 %v686
      %690 = vmatpush1.msra.mxu0 %v685
      %691 = vmatprep.subr.mxu0 %v688
      %692 = vmatpush1.msra.mxu0 %v687
      %693 = vmatprep.subr.mxu0 0.0
      %694 = vmatpush1.msra.mxu0 0.0
      %695 = vmatprep.subr.mxu0 0.0
      %696 = vmatpush1.msra.mxu0 0.0
      %697 = vmatprep.subr.mxu0 0.0
      %698 = vmatpush1.msra.mxu0 0.0
      %699 = vmatprep.subr.mxu0 0.0
      %700 = vmatpush1.msra.mxu0 0.0
      %701 = vmatprep.subr.mxu0 0.0
      %702 = vmatpush1.msra.mxu0 0.0
      %703 = vmatprep.subr.mxu0 0.0
      %704 = vmatpush1.msra.mxu0 0.0
      %705 = vmatprep.subr.mxu0 0.0
      %706 = vmatpush1.msra.mxu0 0.0
      %707 = vmatprep.subr.mxu0 0.0
      %708 = vmatpush1.msra.mxu0 0.0
      %709 = vmatprep.subr.mxu0 0.0
      %710 = vmatpush1.msra.mxu0 0.0
      %711 = vmatprep.subr.mxu0 0.0
      %712 = vmatpush1.msra.mxu0 0.0
      %713 = vmatprep.subr.mxu0 0.0
      %714 = vmatpush1.msra.mxu0 0.0
      %715 = vmatprep.subr.mxu0 0.0
      %716 = vmatpush1.msra.mxu0 0.0
      %717 = vmatprep.subr.mxu0 0.0
      %718 = vmatpush1.msra.mxu0 0.0
      %719 = vmatprep.subr.mxu0 0.0
      %720 = vmatpush1.msra.mxu0 0.0
      %721 = vmatprep.subr.mxu0 0.0
      %722 = vmatpush1.msra.mxu0 0.0
      %723 = vmatprep.subr.mxu0 0.0
      %724 = vmatpush1.msra.mxu0 0.0
      %725 = vmatprep.subr.mxu0 0.0
      %726 = vmatpush1.msra.mxu0 0.0
      %727 = vmatprep.subr.mxu0 0.0
      %728 = vmatpush1.msra.mxu0 0.0
      %729 = vmatprep.subr.mxu0 0.0
      %730 = vmatpush1.msra.mxu0 0.0
      %731 = vmatprep.subr.mxu0 0.0
      %732 = vmatpush1.msra.mxu0 0.0
      %733 = vmatprep.subr.mxu0 0.0
      %734 = vmatpush1.msra.mxu0 0.0
      %735 = vmatprep.subr.mxu0 0.0
      %736 = vmatpush1.msra.mxu0 0.0
      %737 = vmatprep.subr.mxu0 0.0
      %738 = vmatpush1.msra.mxu0 0.0
      %739 = vmatprep.subr.mxu0 0.0
      %740 = vmatpush1.msra.mxu0 0.0
      %741 = vmatprep.subr.mxu0 0.0
      %742 = vmatpush1.msra.mxu0 0.0
      %743 = vmatprep.subr.mxu0 0.0
      %744 = vmatpush1.msra.mxu0 0.0
      %745 = vmatprep.subr.mxu0 0.0
      %746 = vmatpush1.msra.mxu0 0.0
      %747 = vmatprep.subr.mxu0 0.0
      %748 = vmatpush1.msra.mxu0 0.0
      %749 = vmatprep.subr.mxu0 0.0
      %750 = vmatpush1.msra.mxu0 0.0
      %751 = vmatprep.subr.mxu0 0.0
      %752 = vmatpush1.msra.mxu0 0.0
      %753 = vmatprep.mubr.f32.mxu0 0.0
      %754 = vmatmul.mubr.f32.gmra.mrb[0].mxu0 %v600
      %v755 = vpop.f32.mrb[0].mxu0
      %v756 = vadd.f32 1e-06, %v755
      %v757 = vpop.f32.mrb[0].mxu0
      %v758 = vadd.f32 1e-06, %v757
      %759 = vmatprep.mubr.f32.mxu0 0.0
      %760 = vmatmul.mubr.f32.gmra.mrb[0].mxu0 %v602
      %v761 = vpop.f32.mrb[0].mxu0
      %v762 = vadd.f32 1e-06, %v761
      %v763 = vpop.f32.mrb[0].mxu0
      %v764 = vadd.f32 1e-06, %v763
      %765 = vdwg.mxu0
      %v766 = vrsqrt.pop %v756
      %v767 = vrsqrt.pop %v758
      %v768 = vrsqrt.pop %v762
      %v769 = vrsqrt.pop %v764
      %v770 = vmul.f32 %v681, %v766
      %v771 = vmul.f32 %v682, %v767
      %v772 = vmul.f32 %v683, %v768
      %v773 = vmul.f32 %v684, %v769
      %774 = vset.pattern.permute.xlu0 26
      %775 = vperm.xlu0 %774, %v237
      %v776 = vpop.permute.xlu0 %775
      %778 = vset.pattern.permute.xlu0 26
      %779 = vperm.xlu0 %778, %v238
      %v780 = vpop.permute.xlu0 %779
      %v782 = vmul.f32 %v770, %v776
      %v783 = vmul.f32 %v771, %v776
      %v784 = vmul.f32 %v772, %v780
      %v785 = vmul.f32 %v773, %v780
      %786 = vset.pattern.permute.xlu0 27
      %787 = vperm.xlu0 %786, %v237
      %v788 = vpop.permute.xlu0 %787
      %790 = vset.pattern.permute.xlu0 27
      %791 = vperm.xlu0 %790, %v238
      %v792 = vpop.permute.xlu0 %791
      %v794 = vadd.f32 %v782, %v788
      %v795 = vadd.f32 %v783, %v788
      %v796 = vadd.f32 %v784, %v792
      %v797 = vadd.f32 %v785, %v792
      %v798 = vld [vmem:[%s3] sm:$0xff]
      %v799 = vld [vmem:[%s3 + $0x8] sm:$0xff]
      %v800 = vld [vmem:[%s3 + $0x10] sm:$0xff]
      %v801 = vld [vmem:[%s3 + $0x18] sm:$0xff]
      %v802 = vld [vmem:[%s3 + $0x20] sm:$0xff]
      %v803 = vld [vmem:[%s3 + $0x28] sm:$0xff]
      %v804 = vld [vmem:[%s3 + $0x30] sm:$0xff]
      %v805 = vld [vmem:[%s3 + $0x38] sm:$0xff]
      %v806 = vld [vmem:[%s3 + $0x40] sm:$0xff]
      %v807 = vld [vmem:[%s3 + $0x48] sm:$0xff]
      %v808 = vld [vmem:[%s3 + $0x50] sm:$0xff]
      %v809 = vld [vmem:[%s3 + $0x58] sm:$0xff]
      %v810 = vld [vmem:[%s3 + $0x60] sm:$0xff]
      %v811 = vld [vmem:[%s3 + $0x68] sm:$0xff]
      %v812 = vld [vmem:[%s3 + $0x70] sm:$0xff]
      %v813 = vld [vmem:[%s3 + $0x78] sm:$0xff]
      %815 = vset.pattern.permute.xlu0 16
      %816 = vperm.xlu0 %815, %v798
      %v817 = vpop.permute.xlu0 %816
      %820 = vset.pattern.permute.xlu0 16
      %821 = vperm.xlu0 %820, %v799
      %v822 = vpop.permute.xlu0 %821
      %825 = vset.pattern.permute.xlu0 16
      %826 = vperm.xlu0 %825, %v800
      %v827 = vpop.permute.xlu0 %826
      %830 = vset.pattern.permute.xlu0 16
      %831 = vperm.xlu0 %830, %v801
      %v832 = vpop.permute.xlu0 %831
      %835 = vset.pattern.permute.xlu0 16
      %836 = vperm.xlu0 %835, %v802
      %v837 = vpop.permute.xlu0 %836
      %840 = vset.pattern.permute.xlu0 16
      %841 = vperm.xlu0 %840, %v803
      %v842 = vpop.permute.xlu0 %841
      %845 = vset.pattern.permute.xlu0 16
      %846 = vperm.xlu0 %845, %v804
      %v847 = vpop.permute.xlu0 %846
      %850 = vset.pattern.permute.xlu0 16
      %851 = vperm.xlu0 %850, %v805
      %v852 = vpop.permute.xlu0 %851
      %855 = vset.pattern.permute.xlu0 16
      %856 = vperm.xlu0 %855, %v806
      %v857 = vpop.permute.xlu0 %856
      %860 = vset.pattern.permute.xlu0 16
      %861 = vperm.xlu0 %860, %v807
      %v862 = vpop.permute.xlu0 %861
      %865 = vset.pattern.permute.xlu0 16
      %866 = vperm.xlu0 %865, %v808
      %v867 = vpop.permute.xlu0 %866
      %870 = vset.pattern.permute.xlu0 16
      %871 = vperm.xlu0 %870, %v809
      %v872 = vpop.permute.xlu0 %871
      %875 = vset.pattern.permute.xlu0 16
      %876 = vperm.xlu0 %875, %v810
      %v877 = vpop.permute.xlu0 %876
      %880 = vset.pattern.permute.xlu0 16
      %881 = vperm.xlu0 %880, %v811
      %v882 = vpop.permute.xlu0 %881
      %885 = vset.pattern.permute.xlu0 16
      %886 = vperm.xlu0 %885, %v812
      %v887 = vpop.permute.xlu0 %886
      %890 = vset.pattern.permute.xlu0 16
      %891 = vperm.xlu0 %890, %v813
      %v892 = vpop.permute.xlu0 %891
      %v894 = vsel %vm599, %v798, 0
      %v896 = vsel %vm599, %v799, 0
      %v898 = vsel %vm599, %v800, 0
      %v900 = vsel %vm599, %v801, 0
      %v902 = vsel %vm599, %v802, 0
      %v904 = vsel %vm599, %v803, 0
      %v906 = vsel %vm599, %v804, 0
      %v908 = vsel %vm599, %v805, 0
      %v910 = vsel %vm599, %v806, 0
      %v912 = vsel %vm599, %v807, 0
      %v914 = vsel %vm599, %v808, 0
      %v916 = vsel %vm599, %v809, 0
      %v918 = vsel %vm599, %v810, 0
      %v920 = vsel %vm599, %v811, 0
      %v922 = vsel %vm599, %v812, 0
      %v924 = vsel %vm599, %v813, 0
      %926 = vmatprep.subr.mxu0 %v795
      %927 = vmatpush1.msra.mxu0 %v794
      %928 = vmatprep.subr.mxu0 %v797
      %929 = vmatpush1.msra.mxu0 %v796
      %930 = vmatprep.subr.mxu0 0.0
      %931 = vmatpush1.msra.mxu0 0.0
      %932 = vmatprep.subr.mxu0 0.0
      %933 = vmatpush1.msra.mxu0 0.0
      %934 = vmatprep.subr.mxu0 0.0
      %935 = vmatpush1.msra.mxu0 0.0
      %936 = vmatprep.subr.mxu0 0.0
      %937 = vmatpush1.msra.mxu0 0.0
      %938 = vmatprep.subr.mxu0 0.0
      %939 = vmatpush1.msra.mxu0 0.0
      %940 = vmatprep.subr.mxu0 0.0
      %941 = vmatpush1.msra.mxu0 0.0
      %942 = vmatprep.subr.mxu0 0.0
      %943 = vmatpush1.msra.mxu0 0.0
      %944 = vmatprep.subr.mxu0 0.0
      %945 = vmatpush1.msra.mxu0 0.0
      %946 = vmatprep.subr.mxu0 0.0
      %947 = vmatpush1.msra.mxu0 0.0
      %948 = vmatprep.subr.mxu0 0.0
      %949 = vmatpush1.msra.mxu0 0.0
      %950 = vmatprep.subr.mxu0 0.0
      %951 = vmatpush1.msra.mxu0 0.0
      %952 = vmatprep.subr.mxu0 0.0
      %953 = vmatpush1.msra.mxu0 0.0
      %954 = vmatprep.subr.mxu0 0.0
      %955 = vmatpush1.msra.mxu0 0.0
      %956 = vmatprep.subr.mxu0 0.0
      %957 = vmatpush1.msra.mxu0 0.0
      %958 = vmatprep.subr.mxu0 0.0
      %959 = vmatpush1.msra.mxu0 0.0
      %960 = vmatprep.subr.mxu0 0.0
      %961 = vmatpush1.msra.mxu0 0.0
      %962 = vmatprep.subr.mxu0 0.0
      %963 = vmatpush1.msra.mxu0 0.0
      %964 = vmatprep.subr.mxu0 0.0
      %965 = vmatpush1.msra.mxu0 0.0
      %966 = vmatprep.subr.mxu0 0.0
      %967 = vmatpush1.msra.mxu0 0.0
      %968 = vmatprep.subr.mxu0 0.0
      %969 = vmatpush1.msra.mxu0 0.0
      %970 = vmatprep.subr.mxu0 0.0
      %971 = vmatpush1.msra.mxu0 0.0
      %972 = vmatprep.subr.mxu0 0.0
      %973 = vmatpush1.msra.mxu0 0.0
      %974 = vmatprep.subr.mxu0 0.0
      %975 = vmatpush1.msra.mxu0 0.0
      %976 = vmatprep.subr.mxu0 0.0
      %977 = vmatpush1.msra.mxu0 0.0
      %978 = vmatprep.subr.mxu0 0.0
      %979 = vmatpush1.msra.mxu0 0.0
      %980 = vmatprep.subr.mxu0 0.0
      %981 = vmatpush1.msra.mxu0 0.0
      %982 = vmatprep.subr.mxu0 0.0
      %983 = vmatpush1.msra.mxu0 0.0
      %984 = vmatprep.subr.mxu0 0.0
      %985 = vmatpush1.msra.mxu0 0.0
      %986 = vmatprep.subr.mxu0 0.0
      %987 = vmatpush1.msra.mxu0 0.0
      %988 = vmatprep.subr.mxu0 0.0
      %989 = vmatpush1.msra.mxu0 0.0
      %990 = vmatprep.mubr.f32.mxu0 0.0
      %991 = vmatmul.mubr.f32.gmra.mrb[0].mxu0 %v894
      %v992 = vpop.f32.mrb[0].mxu0
      %v993 = vadd.f32 %v817, %v992
      %v994 = vpop.f32.mrb[0].mxu0
      %v995 = vadd.f32 %v817, %v994
      %996 = vmatprep.mubr.f32.mxu0 0.0
      %997 = vmatmul.mubr.f32.gmra.mrb[0].mxu0 %v896
      %v998 = vpop.f32.mrb[0].mxu0
      %v999 = vadd.f32 %v822, %v998
      %v1000 = vpop.f32.mrb[0].mxu0
      %v1001 = vadd.f32 %v822, %v1000
      %1002 = vmatprep.mubr.f32.mxu0 0.0
      %1003 = vmatmul.mubr.f32.gmra.mrb[0].mxu0 %v898
      %v1004 = vpop.f32.mrb[0].mxu0
      %v1005 = vadd.f32 %v827, %v1004
      %v1006 = vpop.f32.mrb[0].mxu0
      %v1007 = vadd.f32 %v827, %v1006
      %1008 = vmatprep.mubr.f32.mxu0 0.0
      %1009 = vmatmul.mubr.f32.gmra.mrb[0].mxu0 %v900
      %v1010 = vpop.f32.mrb[0].mxu0
      %v1011 = vadd.f32 %v832, %v1010
      %v1012 = vpop.f32.mrb[0].mxu0
      %v1013 = vadd.f32 %v832, %v1012
      %1014 = vmatprep.mubr.f32.mxu0 0.0
      %1015 = vmatmul.mubr.f32.gmra.mrb[0].mxu0 %v902
      %v1016 = vpop.f32.mrb[0].mxu0
      %v1017 = vadd.f32 %v837, %v1016
      %v1018 = vpop.f32.mrb[0].mxu0
      %v1019 = vadd.f32 %v837, %v1018
      %1020 = vmatprep.mubr.f32.mxu0 0.0
      %1021 = vmatmul.mubr.f32.gmra.mrb[0].mxu0 %v904
      %v1022 = vpop.f32.mrb[0].mxu0
      %v1023 = vadd.f32 %v842, %v1022
      %v1024 = vpop.f32.mrb[0].mxu0
      %v1025 = vadd.f32 %v842, %v1024
      %1026 = vmatprep.mubr.f32.mxu0 0.0
      %1027 = vmatmul.mubr.f32.gmra.mrb[0].mxu0 %v906
      %v1028 = vpop.f32.mrb[0].mxu0
      %v1029 = vadd.f32 %v847, %v1028
      %v1030 = vpop.f32.mrb[0].mxu0
      %v1031 = vadd.f32 %v847, %v1030
      %1032 = vmatprep.mubr.f32.mxu0 0.0
      %1033 = vmatmul.mubr.f32.gmra.mrb[0].mxu0 %v908
      %v1034 = vpop.f32.mrb[0].mxu0
      %v1035 = vadd.f32 %v852, %v1034
      %v1036 = vpop.f32.mrb[0].mxu0
      %v1037 = vadd.f32 %v852, %v1036
      %1038 = vmatprep.mubr.f32.mxu0 0.0
      %1039 = vmatmul.mubr.f32.gmra.mrb[0].mxu0 %v910
      %v1040 = vpop.f32.mrb[0].mxu0
      %v1041 = vadd.f32 %v857, %v1040
      %v1042 = vpop.f32.mrb[0].mxu0
      %v1043 = vadd.f32 %v857, %v1042
      %1044 = vmatprep.mubr.f32.mxu0 0.0
      %1045 = vmatmul.mubr.f32.gmra.mrb[0].mxu0 %v912
      %v1046 = vpop.f32.mrb[0].mxu0
      %v1047 = vadd.f32 %v862, %v1046
      %v1048 = vpop.f32.mrb[0].mxu0
      %v1049 = vadd.f32 %v862, %v1048
      %1050 = vmatprep.mubr.f32.mxu0 0.0
      %1051 = vmatmul.mubr.f32.gmra.mrb[0].mxu0 %v914
      %v1052 = vpop.f32.mrb[0].mxu0
      %v1053 = vadd.f32 %v867, %v1052
      %v1054 = vpop.f32.mrb[0].mxu0
      %v1055 = vadd.f32 %v867, %v1054
      %1056 = vmatprep.mubr.f32.mxu0 0.0
      %1057 = vmatmul.mubr.f32.gmra.mrb[0].mxu0 %v916
      %v1058 = vpop.f32.mrb[0].mxu0
      %v1059 = vadd.f32 %v872, %v1058
      %v1060 = vpop.f32.mrb[0].mxu0
      %v1061 = vadd.f32 %v872, %v1060
      %1062 = vmatprep.mubr.f32.mxu0 0.0
      %1063 = vmatmul.mubr.f32.gmra.mrb[0].mxu0 %v918
      %v1064 = vpop.f32.mrb[0].mxu0
      %v1065 = vadd.f32 %v877, %v1064
      %v1066 = vpop.f32.mrb[0].mxu0
      %v1067 = vadd.f32 %v877, %v1066
      %1068 = vmatprep.mubr.f32.mxu0 0.0
      %1069 = vmatmul.mubr.f32.gmra.mrb[0].mxu0 %v920
      %v1070 = vpop.f32.mrb[0].mxu0
      %v1071 = vadd.f32 %v882, %v1070
      %v1072 = vpop.f32.mrb[0].mxu0
      %v1073 = vadd.f32 %v882, %v1072
      %1074 = vmatprep.mubr.f32.mxu0 0.0
      %1075 = vmatmul.mubr.f32.gmra.mrb[0].mxu0 %v922
      %v1076 = vpop.f32.mrb[0].mxu0
      %v1077 = vadd.f32 %v887, %v1076
      %v1078 = vpop.f32.mrb[0].mxu0
      %v1079 = vadd.f32 %v887, %v1078
      %1080 = vmatprep.mubr.f32.mxu0 0.0
      %1081 = vmatmul.mubr.f32.gmra.mrb[0].mxu0 %v924
      %v1082 = vpop.f32.mrb[0].mxu0
      %v1083 = vadd.f32 %v892, %v1082
      %v1084 = vpop.f32.mrb[0].mxu0
      %v1085 = vadd.f32 %v892, %v1084
      %1086 = vdwg.mxu0
      %v1087 = vmul.f32 %v993, 0.5
      %v1088 = vmul.f32 %v995, 0.5
      %v1089 = vmul.f32 %v999, 0.5
      %v1090 = vmul.f32 %v1001, 0.5
      %v1091 = vmul.f32 %v1005, 0.5
      %v1092 = vmul.f32 %v1007, 0.5
      %v1093 = vmul.f32 %v1011, 0.5
      %v1094 = vmul.f32 %v1013, 0.5
      %v1095 = vmul.f32 %v1017, 0.5
      %v1096 = vmul.f32 %v1019, 0.5
      %v1097 = vmul.f32 %v1023, 0.5
      %v1098 = vmul.f32 %v1025, 0.5
      %v1099 = vmul.f32 %v1029, 0.5
      %v1100 = vmul.f32 %v1031, 0.5
      %v1101 = vmul.f32 %v1035, 0.5
      %v1102 = vmul.f32 %v1037, 0.5
      %v1103 = vmul.f32 %v1041, 0.5
      %v1104 = vmul.f32 %v1043, 0.5
      %v1105 = vmul.f32 %v1047, 0.5
      %v1106 = vmul.f32 %v1049, 0.5
      %v1107 = vmul.f32 %v1053, 0.5
      %v1108 = vmul.f32 %v1055, 0.5
      %v1109 = vmul.f32 %v1059, 0.5
      %v1110 = vmul.f32 %v1061, 0.5
      %v1111 = vmul.f32 %v1065, 0.5
      %v1112 = vmul.f32 %v1067, 0.5
      %v1113 = vmul.f32 %v1071, 0.5
      %v1114 = vmul.f32 %v1073, 0.5
      %v1115 = vmul.f32 %v1077, 0.5
      %v1116 = vmul.f32 %v1079, 0.5
      %v1117 = vmul.f32 %v1083, 0.5
      %v1118 = vmul.f32 %v1085, 0.5
      %v1119 = vmul.f32 %v993, 0.70710677
      %v1120 = vmul.f32 %v995, 0.70710677
      %v1121 = vmul.f32 %v999, 0.70710677
      %v1122 = vmul.f32 %v1001, 0.70710677
      %v1123 = vmul.f32 %v1005, 0.70710677
      %v1124 = vmul.f32 %v1007, 0.70710677
      %v1125 = vmul.f32 %v1011, 0.70710677
      %v1126 = vmul.f32 %v1013, 0.70710677
      %v1127 = vmul.f32 %v1017, 0.70710677
      %v1128 = vmul.f32 %v1019, 0.70710677
      %v1129 = vmul.f32 %v1023, 0.70710677
      %v1130 = vmul.f32 %v1025, 0.70710677
      %v1131 = vmul.f32 %v1029, 0.70710677
      %v1132 = vmul.f32 %v1031, 0.70710677
      %v1133 = vmul.f32 %v1035, 0.70710677
      %v1134 = vmul.f32 %v1037, 0.70710677
      %v1135 = vmul.f32 %v1041, 0.70710677
      %v1136 = vmul.f32 %v1043, 0.70710677
      %v1137 = vmul.f32 %v1047, 0.70710677
      %v1138 = vmul.f32 %v1049, 0.70710677
      %v1139 = vmul.f32 %v1053, 0.70710677
      %v1140 = vmul.f32 %v1055, 0.70710677
      %v1141 = vmul.f32 %v1059, 0.70710677
      %v1142 = vmul.f32 %v1061, 0.70710677
      %v1143 = vmul.f32 %v1065, 0.70710677
      %v1144 = vmul.f32 %v1067, 0.70710677
      %v1145 = vmul.f32 %v1071, 0.70710677
      %v1146 = vmul.f32 %v1073, 0.70710677
      %v1147 = vmul.f32 %v1077, 0.70710677
      %v1148 = vmul.f32 %v1079, 0.70710677
      %v1149 = vmul.f32 %v1083, 0.70710677
      %v1150 = vmul.f32 %v1085, 0.70710677
      %v1151 = verf.f32.pop %v1119
      %v1152 = verf.f32.pop %v1120
      %v1153 = verf.f32.pop %v1121
      %v1154 = verf.f32.pop %v1122
      %v1155 = verf.f32.pop %v1123
      %v1156 = verf.f32.pop %v1124
      %v1157 = verf.f32.pop %v1125
      %v1158 = verf.f32.pop %v1126
      %v1159 = verf.f32.pop %v1127
      %v1160 = verf.f32.pop %v1128
      %v1161 = verf.f32.pop %v1129
      %v1162 = verf.f32.pop %v1130
      %v1163 = verf.f32.pop %v1131
      %v1164 = verf.f32.pop %v1132
      %v1165 = verf.f32.pop %v1133
      %v1166 = verf.f32.pop %v1134
      %v1167 = verf.f32.pop %v1135
      %v1168 = verf.f32.pop %v1136
      %v1169 = verf.f32.pop %v1137
      %v1170 = verf.f32.pop %v1138
      %v1171 = verf.f32.pop %v1139
      %v1172 = verf.f32.pop %v1140
      %v1173 = verf.f32.pop %v1141
      %v1174 = verf.f32.pop %v1142
      %v1175 = verf.f32.pop %v1143
      %v1176 = verf.f32.pop %v1144
      %v1177 = verf.f32.pop %v1145
      %v1178 = verf.f32.pop %v1146
      %v1179 = verf.f32.pop %v1147
      %v1180 = verf.f32.pop %v1148
      %v1181 = verf.f32.pop %v1149
      %v1182 = verf.f32.pop %v1150
      %v1183 = vadd.f32 %v1151, 1.0
      %v1184 = vadd.f32 %v1152, 1.0
      %v1185 = vadd.f32 %v1153, 1.0
      %v1186 = vadd.f32 %v1154, 1.0
      %v1187 = vadd.f32 %v1155, 1.0
      %v1188 = vadd.f32 %v1156, 1.0
      %v1189 = vadd.f32 %v1157, 1.0
      %v1190 = vadd.f32 %v1158, 1.0
      %v1191 = vadd.f32 %v1159, 1.0
      %v1192 = vadd.f32 %v1160, 1.0
      %v1193 = vadd.f32 %v1161, 1.0
      %v1194 = vadd.f32 %v1162, 1.0
      %v1195 = vadd.f32 %v1163, 1.0
      %v1196 = vadd.f32 %v1164, 1.0
      %v1197 = vadd.f32 %v1165, 1.0
      %v1198 = vadd.f32 %v1166, 1.0
      %v1199 = vadd.f32 %v1167, 1.0
      %v1200 = vadd.f32 %v1168, 1.0
      %v1201 = vadd.f32 %v1169, 1.0
      %v1202 = vadd.f32 %v1170, 1.0
      %v1203 = vadd.f32 %v1171, 1.0
      %v1204 = vadd.f32 %v1172, 1.0
      %v1205 = vadd.f32 %v1173, 1.0
      %v1206 = vadd.f32 %v1174, 1.0
      %v1207 = vadd.f32 %v1175, 1.0
      %v1208 = vadd.f32 %v1176, 1.0
      %v1209 = vadd.f32 %v1177, 1.0
      %v1210 = vadd.f32 %v1178, 1.0
      %v1211 = vadd.f32 %v1179, 1.0
      %v1212 = vadd.f32 %v1180, 1.0
      %v1213 = vadd.f32 %v1181, 1.0
      %v1214 = vadd.f32 %v1182, 1.0
      %v1215 = vmul.f32 %v1087, %v1183
      %v1216 = vmul.f32 %v1088, %v1184
      %v1217 = vmul.f32 %v1089, %v1185
      %v1218 = vmul.f32 %v1090, %v1186
      %v1219 = vmul.f32 %v1091, %v1187
      %v1220 = vmul.f32 %v1092, %v1188
      %v1221 = vmul.f32 %v1093, %v1189
      %v1222 = vmul.f32 %v1094, %v1190
      %v1223 = vmul.f32 %v1095, %v1191
      %v1224 = vmul.f32 %v1096, %v1192
      %v1225 = vmul.f32 %v1097, %v1193
      %v1226 = vmul.f32 %v1098, %v1194
      %v1227 = vmul.f32 %v1099, %v1195
      %v1228 = vmul.f32 %v1100, %v1196
      %v1229 = vmul.f32 %v1101, %v1197
      %v1230 = vmul.f32 %v1102, %v1198
      %v1231 = vmul.f32 %v1103, %v1199
      %v1232 = vmul.f32 %v1104, %v1200
      %v1233 = vmul.f32 %v1105, %v1201
      %v1234 = vmul.f32 %v1106, %v1202
      %v1235 = vmul.f32 %v1107, %v1203
      %v1236 = vmul.f32 %v1108, %v1204
      %v1237 = vmul.f32 %v1109, %v1205
      %v1238 = vmul.f32 %v1110, %v1206
      %v1239 = vmul.f32 %v1111, %v1207
      %v1240 = vmul.f32 %v1112, %v1208
      %v1241 = vmul.f32 %v1113, %v1209
      %v1242 = vmul.f32 %v1114, %v1210
      %v1243 = vmul.f32 %v1115, %v1211
      %v1244 = vmul.f32 %v1116, %v1212
      %v1245 = vmul.f32 %v1117, %v1213
      %v1246 = vmul.f32 %v1118, %v1214
      %v1247 = vld [vmem:[%s4] sm:$0xff]
      %v1248 = vld [vmem:[%s4 + $0x8] sm:$0xff]
      %1249 = vset.pattern.permute.xlu0 28
      %1250 = vperm.xlu0 %1249, %v237
      %v1251 = vpop.permute.xlu0 %1250
      %1253 = vset.pattern.permute.xlu0 28
      %1254 = vperm.xlu0 %1253, %v238
      %v1255 = vpop.permute.xlu0 %1254
      %1257 = vmatprep.subr.mxu0 %v1216
      %1258 = vmatpush1.msra.mxu0 %v1215
      %1259 = vmatprep.subr.mxu0 %v1218
      %1260 = vmatpush1.msra.mxu0 %v1217
      %1261 = vmatprep.subr.mxu0 %v1220
      %1262 = vmatpush1.msra.mxu0 %v1219
      %1263 = vmatprep.subr.mxu0 %v1222
      %1264 = vmatpush1.msra.mxu0 %v1221
      %1265 = vmatprep.subr.mxu0 %v1224
      %1266 = vmatpush1.msra.mxu0 %v1223
      %1267 = vmatprep.subr.mxu0 %v1226
      %1268 = vmatpush1.msra.mxu0 %v1225
      %1269 = vmatprep.subr.mxu0 %v1228
      %1270 = vmatpush1.msra.mxu0 %v1227
      %1271 = vmatprep.subr.mxu0 %v1230
      %1272 = vmatpush1.msra.mxu0 %v1229
      %1273 = vmatprep.subr.mxu0 %v1232
      %1274 = vmatpush1.msra.mxu0 %v1231
      %1275 = vmatprep.subr.mxu0 %v1234
      %1276 = vmatpush1.msra.mxu0 %v1233
      %1277 = vmatprep.subr.mxu0 %v1236
      %1278 = vmatpush1.msra.mxu0 %v1235
      %1279 = vmatprep.subr.mxu0 %v1238
      %1280 = vmatpush1.msra.mxu0 %v1237
      %1281 = vmatprep.subr.mxu0 %v1240
      %1282 = vmatpush1.msra.mxu0 %v1239
      %1283 = vmatprep.subr.mxu0 %v1242
      %1284 = vmatpush1.msra.mxu0 %v1241
      %1285 = vmatprep.subr.mxu0 %v1244
      %1286 = vmatpush1.msra.mxu0 %v1243
      %1287 = vmatprep.subr.mxu0 %v1246
      %1288 = vmatpush1.msra.mxu0 %v1245
      %1289 = vmatprep.subr.mxu0 0.0
      %1290 = vmatpush1.msra.mxu0 0.0
      %1291 = vmatprep.subr.mxu0 0.0
      %1292 = vmatpush1.msra.mxu0 0.0
      %1293 = vmatprep.subr.mxu0 0.0
      %1294 = vmatpush1.msra.mxu0 0.0
      %1295 = vmatprep.subr.mxu0 0.0
      %1296 = vmatpush1.msra.mxu0 0.0
      %1297 = vmatprep.subr.mxu0 0.0
      %1298 = vmatpush1.msra.mxu0 0.0
      %1299 = vmatprep.subr.mxu0 0.0
      %1300 = vmatpush1.msra.mxu0 0.0
      %1301 = vmatprep.subr.mxu0 0.0
      %1302 = vmatpush1.msra.mxu0 0.0
      %1303 = vmatprep.subr.mxu0 0.0
      %1304 = vmatpush1.msra.mxu0 0.0
      %1305 = vmatprep.subr.mxu0 0.0
      %1306 = vmatpush1.msra.mxu0 0.0
      %1307 = vmatprep.subr.mxu0 0.0
      %1308 = vmatpush1.msra.mxu0 0.0
      %1309 = vmatprep.subr.mxu0 0.0
      %1310 = vmatpush1.msra.mxu0 0.0
      %1311 = vmatprep.subr.mxu0 0.0
      %1312 = vmatpush1.msra.mxu0 0.0
      %1313 = vmatprep.subr.mxu0 0.0
      %1314 = vmatpush1.msra.mxu0 0.0
      %1315 = vmatprep.subr.mxu0 0.0
      %1316 = vmatpush1.msra.mxu0 0.0
      %1317 = vmatprep.subr.mxu0 0.0
      %1318 = vmatpush1.msra.mxu0 0.0
      %1319 = vmatprep.subr.mxu0 0.0
      %1320 = vmatpush1.msra.mxu0 0.0
      %1321 = vmatprep.mubr.f32.mxu0 0.0
      %1322 = vmatmul.mubr.f32.gmra.mrb[0].mxu0 %v1247
      %v1323 = vpop.f32.mrb[0].mxu0
      %v1324 = vadd.f32 %v1251, %v1323
      %v1325 = vpop.f32.mrb[0].mxu0
      %v1326 = vadd.f32 %v1251, %v1325
      %1327 = vmatprep.mubr.f32.mxu0 0.0
      %1328 = vmatmul.mubr.f32.gmra.mrb[0].mxu0 %v1248
      %v1329 = vpop.f32.mrb[0].mxu0
      %v1330 = vadd.f32 %v1255, %v1329
      %v1331 = vpop.f32.mrb[0].mxu0
      %v1332 = vadd.f32 %v1255, %v1331
      %1333 = vdwg.mxu0
      %1334 = vset.pattern.permute.xlu0 29
      %1335 = vperm.xlu0 %1334, %v237
      %v1336 = vpop.permute.xlu0 %1335
      %1338 = vset.pattern.permute.xlu0 29
      %1339 = vperm.xlu0 %1338, %v238
      %v1340 = vpop.permute.xlu0 %1339
      %v1342 = vmul.f32 %v1324, %v1336
      %v1343 = vmul.f32 %v1326, %v1336
      %v1344 = vmul.f32 %v1330, %v1340
      %v1345 = vmul.f32 %v1332, %v1340
      %v1346 = vadd.f32 %v233, %v1342
      %v1347 = vadd.f32 %v234, %v1343
      %v1348 = vadd.f32 %v235, %v1344
      %v1349 = vadd.f32 %v236, %v1345
      %1350 = vst [vmem:[%s231] sm:$0xff] %v1346
      %1351 = vst [vmem:[%s231 + $0x8] sm:$0xff] %v1347
      %1352 = vst [vmem:[%s231 + $0x10] sm:$0xff] %v1348
      %1353 = vst [vmem:[%s231 + $0x18] sm:$0xff] %v1349
      %s1354 = smul.u32 2, %s16
      %p1355 = scmp.lt.s32.totalorder %s1354, 7
      %s1356 = scalar_select %p1355, %s1354, 7
      %s1357 = smul.addr %s1356, 2
      %s1358 = smul.addr %s1357, 8
      %s1359 = scalar_lea.vmem %s5, %s1358
      // Predicated region
      $region41: #{convnext_block.1} parent=39 // pred_check
        %p1360 = pneg %p144
      $region42: #{convnext_block.1} parent=39 // pred_check_branch
        %1362 = sbr.rel (%p1360) target = $region44
      $region43: #{convnext_block.1} parent=39 // pred_region
        %s1363 = smul.u32 2, %s16
      $region44: #{convnext_block.1} parent=39 // pred_fallthru
        _
    $region40: #{convnext_block.1} parent=5 // pred_fallthru
      _
    %p1364 = scmp.le.s32.totalorder 2, %s11
    // Predicated region
    $region45: #{convnext_block.1} parent=5 // pred_check
      %p1365 = pneg %p1364
    $region46: #{convnext_block.1} parent=5 // pred_check_branch
      %1367 = sbr.rel (%p1365) target = $region48
    $region47: #{convnext_block.1} parent=5 // pred_region
      %s1368 = ssub.s32 %s11, 2
      // Predicated region
      $region49: #{convnext_block.1} parent=47 // pred_check
        %p1369 = pneg %p150
      $region50: #{convnext_block.1} parent=47 // pred_check_branch
        %1371 = sbr.rel (%p1369) target = $region52
      $region51: #{convnext_block.1} parent=47 // pred_region
        %s1372 = smul.u32 2, %s17
        %p1373 = scmp.lt.s32.totalorder %s1372, 7
        %s1374 = scalar_select %p1373, %s1372, 7
        %s1375 = smul.addr %s1374, 2
        %s1376 = smul.addr %s1375, 8
        %s1377 = scalar_lea.vmem %s5, %s1376
      $region52: #{convnext_block.1} parent=47 // pred_fallthru
        _
    $region48: #{convnext_block.1} parent=5 // pred_fallthru
      _
  $region6: #{convnext_block.1} parent=0 // loop_footer
    %s15 = sadd.s32 1, %s11
  $region7: #{convnext_block.1} parent=0 // loop_footer_branch
    %10 = sbr.rel target = $region3
  $region8: #{convnext_block.1} parent=0 // loop_exit
    _

</llo_original>
